<compile_context>
chip_gen: v7x
topology: tpu7x:2x2x1
jax: 0.10.0
libtpu: 0.0.40
codegen_flags: <defaults>
</compile_context>

<pallas_src>
import jax
import jax.numpy as jnp
from jax.experimental import pallas as pl
from jax.experimental.pallas import tpu as pltpu


def _double_conv_kernel(x_ref, w1_ref, b1_ref, w2_ref, b2_ref, o_ref, h1_ref):
    # x_ref : (1, H+2, W+4, C_in)   NHWC input, padded 1 row / 2 cols per side
    # w*_ref: (3, 3, C_in, C_out)   HWIO weights
    # b*_ref: (1, C_out)
    # o_ref : (1, H, W, C2)         NHWC output
    # h1_ref: (H+2, W+2, C1) f32    VMEM scratch: conv1 output with 1-halo ring
    _, hp2, wp4, _ = x_ref.shape
    H = hp2 - 2
    W = wp4 - 4
    C1 = w1_ref.shape[3]
    C2 = w2_ref.shape[3]

    # Hoisted loop invariants: weight taps, broadcast biases, halo-column mask.
    # (Loaded/broadcast once; closed over by the fori_loop bodies.)
    w1 = [[w1_ref[di, dj] for dj in range(3)] for di in range(3)]
    w2 = [[w2_ref[di, dj] for dj in range(3)] for di in range(3)]
    b1_full = jnp.broadcast_to(b1_ref[...], (W + 2, C1)).astype(jnp.float32)
    b2_full = jnp.broadcast_to(b2_ref[...], (W, C2)).astype(jnp.float32)

    col = jax.lax.broadcasted_iota(jnp.int32, (W + 2, 1), 0)
    col_mask = jnp.broadcast_to((col >= 1) & (col <= W), (W + 2, C1))

    # Zero the top/bottom halo rows of the intermediate (conv2 sees zero pad).
    zero_row = jnp.zeros((W + 2, C1), jnp.float32)
    h1_ref[0] = zero_row
    h1_ref[H + 1] = zero_row

    # ---- conv1 + ReLU: one extended row (width W+2) per iteration ----------
    def conv1_row(i, carry):
        acc = b1_full                                     # bias as acc init
        for di in range(3):
            row = x_ref[0, i + di]                        # (W+4, C_in)
            for dj in range(3):
                acc = acc + jnp.dot(row[dj:dj + W + 2, :], w1[di][dj],
                                    preferred_element_type=jnp.float32)
        h = jnp.maximum(acc, 0.0)
        # Halo columns 0 and W+1 must stay zero for conv2's implicit padding.
        h1_ref[i + 1] = jnp.where(col_mask, h, 0.0)
        return carry

    jax.lax.fori_loop(0, H, conv1_row, 0)

    # ---- conv2 + ReLU: one output row (width W) per iteration --------------
    def conv2_row(i, carry):
        acc = b2_full                                     # bias as acc init
        for di in range(3):
            hrow = h1_ref[i + di]                         # (W+2, C1)
            for dj in range(3):
                acc = acc + jnp.dot(hrow[dj:dj + W, :], w2[di][dj],
                                    preferred_element_type=jnp.float32)
        o_ref[0, i] = jnp.maximum(acc, 0.0).astype(o_ref.dtype)
        return carry

    jax.lax.fori_loop(0, H, conv2_row, 0)


@jax.jit
def double_convolution(x, w1, b1, w2, b2):
    """Forward pass of DoubleConvolution.

    x : [N, C_in, H, W]         (NCHW, like PyTorch)
    w1: [C1, C_in, 3, 3]        (PyTorch Conv2d OIHW)
    b1: [C1]
    w2: [C2, C1, 3, 3]
    b2: [C2]
    returns [N, C2, H, W]
    """
    N, C_in, H, W = x.shape
    C1 = w1.shape[0]
    C2 = w2.shape[0]

    # Thin XLA glue: channels-last + spatial zero pad (1 row / 2 cols per side).
    x_nhwc = jnp.transpose(x, (0, 2, 3, 1))
    x_pad = jnp.pad(x_nhwc, ((0, 0), (1, 1), (2, 2), (0, 0)))
    w1_hwio = jnp.transpose(w1, (2, 3, 1, 0))             # (3,3,C_in,C1)
    w2_hwio = jnp.transpose(w2, (2, 3, 1, 0))             # (3,3,C1,C2)
    b1_row = b1.reshape(1, C1)
    b2_row = b2.reshape(1, C2)

    flops = 2 * 9 * N * H * W * (C_in * C1 + C1 * C2)
    bytes_accessed = 4 * (x_pad.size + w1_hwio.size + w2_hwio.size
                          + b1_row.size + b2_row.size + N * H * W * C2)

    out_nhwc = pl.pallas_call(
        _double_conv_kernel,
        out_shape=jax.ShapeDtypeStruct((N, H, W, C2), x.dtype),
        grid_spec=pltpu.PrefetchScalarGridSpec(
            num_scalar_prefetch=0,
            grid=(N,),
            in_specs=[
                pl.BlockSpec((1, H + 2, W + 4, C_in), lambda n: (n, 0, 0, 0)),
                # Constant index maps: weights/biases DMA'd once, stay resident.
                pl.BlockSpec((3, 3, C_in, C1), lambda n: (0, 0, 0, 0)),
                pl.BlockSpec((1, C1), lambda n: (0, 0)),
                pl.BlockSpec((3, 3, C1, C2), lambda n: (0, 0, 0, 0)),
                pl.BlockSpec((1, C2), lambda n: (0, 0)),
            ],
            out_specs=pl.BlockSpec((1, H, W, C2), lambda n: (n, 0, 0, 0)),
            scratch_shapes=[pltpu.VMEM((H + 2, W + 2, C1), jnp.float32)],
        ),
        compiler_params=pltpu.CompilerParams(
            dimension_semantics=("parallel",)),
        cost_estimate=pl.CostEstimate(
            flops=flops, transcendentals=0, bytes_accessed=bytes_accessed),
    )(x_pad, w1_hwio, b1_row, w2_hwio, b2_row)

    return jnp.transpose(out_nhwc, (0, 3, 1, 2))


def _reference(x, w1, b1, w2, b2):
    """Pure-JAX reference: Conv2d(3x3, pad=1) -> ReLU -> Conv2d -> ReLU."""
    dn = jax.lax.conv_dimension_numbers(x.shape, w1.shape, ("NCHW", "OIHW", "NCHW"))
    y = jax.lax.conv_general_dilated(
        x, w1, (1, 1), ((1, 1), (1, 1)), dimension_numbers=dn,
        precision=jax.lax.Precision.HIGHEST)
    y = jnp.maximum(y + b1[None, :, None, None], 0.0)
    dn2 = jax.lax.conv_dimension_numbers(y.shape, w2.shape, ("NCHW", "OIHW", "NCHW"))
    y = jax.lax.conv_general_dilated(
        y, w2, (1, 1), ((1, 1), (1, 1)), dimension_numbers=dn2,
        precision=jax.lax.Precision.HIGHEST)
    return jnp.maximum(y + b2[None, :, None, None], 0.0)


if __name__ == "__main__":
    key = jax.random.PRNGKey(0)
    kx, kw1, kb1, kw2, kb2 = jax.random.split(key, 5)

    # Small shapes consistent with the module's forward (NCHW).
    N, C_in, C_out, H, W = 2, 4, 8, 16, 16

    x = jax.random.normal(kx, (N, C_in, H, W), dtype=jnp.float32)

    # Deterministic synthetic params matching PyTorch Conv2d shapes/init scale.
    bound1 = 1.0 / ((C_in * 9) ** 0.5)
    w1 = jax.random.uniform(kw1, (C_out, C_in, 3, 3), jnp.float32, -bound1, bound1)
    b1 = jax.random.uniform(kb1, (C_out,), jnp.float32, -bound1, bound1)
    bound2 = 1.0 / ((C_out * 9) ** 0.5)
    w2 = jax.random.uniform(kw2, (C_out, C_out, 3, 3), jnp.float32, -bound2, bound2)
    b2 = jax.random.uniform(kb2, (C_out,), jnp.float32, -bound2, bound2)

    out = double_convolution(x, w1, b1, w2, b2)
    out = jax.block_until_ready(out)

    ref = _reference(x, w1, b1, w2, b2)
    assert out.shape == (N, C_out, H, W), out.shape
    assert jnp.allclose(out, ref, atol=2e-2, rtol=2e-2), \
        float(jnp.max(jnp.abs(out - ref)))

    print("KERNEL_OK")
</pallas_src>

<mosaic_0001>
module attributes {stable_mosaic.version = 11 : i64} {
  func.func @_double_conv_kernel(%arg0: i32, %arg1: memref<1x18x20x4xf32, #tpu.memory_space<vmem>>, %arg2: memref<3x3x4x8xf32, #tpu.memory_space<vmem>>, %arg3: memref<1x8xf32, #tpu.memory_space<vmem>>, %arg4: memref<3x3x8x8xf32, #tpu.memory_space<vmem>>, %arg5: memref<1x8xf32, #tpu.memory_space<vmem>>, %arg6: memref<1x16x16x8xf32, #tpu.memory_space<vmem>>, %arg7: memref<18x18x8xf32, #tpu.memory_space<vmem>>) attributes {dimension_semantics = [#tpu.dimension_semantics<parallel>], iteration_bounds = array<i64: 2>, scalar_prefetch = 0 : i64, scratch_operands = 1 : i64, tpu.core_type = #tpu.core_type<tc>, window_params = [{transform_indices = @transform_0, window_bounds = array<i64: 1, 18, 20, 4>}, {pipeline_mode = #tpu.pipeline_mode<synchronous>, transform_indices = @transform_1, window_bounds = array<i64: 3, 3, 4, 8>}, {pipeline_mode = #tpu.pipeline_mode<synchronous>, transform_indices = @transform_2, window_bounds = array<i64: 1, 8>}, {pipeline_mode = #tpu.pipeline_mode<synchronous>, transform_indices = @transform_3, window_bounds = array<i64: 3, 3, 8, 8>}, {pipeline_mode = #tpu.pipeline_mode<synchronous>, transform_indices = @transform_4, window_bounds = array<i64: 1, 8>}, {transform_indices = @transform_5, window_bounds = array<i64: 1, 16, 16, 8>}]} {
    %c0 = arith.constant 0 : index
    %c0_0 = arith.constant 0 : index
    %c0_1 = arith.constant 0 : index
    %c0_2 = arith.constant 0 : index
    %0 = vector.load %arg2[%c0, %c0_0, %c0_1, %c0_2] : memref<3x3x4x8xf32, #tpu.memory_space<vmem>>, vector<1x1x4x8xf32>
    %1 = vector.shape_cast %0 : vector<1x1x4x8xf32> to vector<4x8xf32>
    %c0_3 = arith.constant 0 : index
    %c1 = arith.constant 1 : index
    %c0_4 = arith.constant 0 : index
    %c0_5 = arith.constant 0 : index
    %2 = vector.load %arg2[%c0_3, %c1, %c0_4, %c0_5] : memref<3x3x4x8xf32, #tpu.memory_space<vmem>>, vector<1x1x4x8xf32>
    %3 = vector.shape_cast %2 : vector<1x1x4x8xf32> to vector<4x8xf32>
    %c0_6 = arith.constant 0 : index
    %c2 = arith.constant 2 : index
    %c0_7 = arith.constant 0 : index
    %c0_8 = arith.constant 0 : index
    %4 = vector.load %arg2[%c0_6, %c2, %c0_7, %c0_8] : memref<3x3x4x8xf32, #tpu.memory_space<vmem>>, vector<1x1x4x8xf32>
    %5 = vector.shape_cast %4 : vector<1x1x4x8xf32> to vector<4x8xf32>
    %c1_9 = arith.constant 1 : index
    %c0_10 = arith.constant 0 : index
    %c0_11 = arith.constant 0 : index
    %c0_12 = arith.constant 0 : index
    %6 = vector.load %arg2[%c1_9, %c0_10, %c0_11, %c0_12] : memref<3x3x4x8xf32, #tpu.memory_space<vmem>>, vector<1x1x4x8xf32>
    %7 = vector.shape_cast %6 : vector<1x1x4x8xf32> to vector<4x8xf32>
    %c1_13 = arith.constant 1 : index
    %c1_14 = arith.constant 1 : index
    %c0_15 = arith.constant 0 : index
    %c0_16 = arith.constant 0 : index
    %8 = vector.load %arg2[%c1_13, %c1_14, %c0_15, %c0_16] : memref<3x3x4x8xf32, #tpu.memory_space<vmem>>, vector<1x1x4x8xf32>
    %9 = vector.shape_cast %8 : vector<1x1x4x8xf32> to vector<4x8xf32>
    %c1_17 = arith.constant 1 : index
    %c2_18 = arith.constant 2 : index
    %c0_19 = arith.constant 0 : index
    %c0_20 = arith.constant 0 : index
    %10 = vector.load %arg2[%c1_17, %c2_18, %c0_19, %c0_20] : memref<3x3x4x8xf32, #tpu.memory_space<vmem>>, vector<1x1x4x8xf32>
    %11 = vector.shape_cast %10 : vector<1x1x4x8xf32> to vector<4x8xf32>
    %c2_21 = arith.constant 2 : index
    %c0_22 = arith.constant 0 : index
    %c0_23 = arith.constant 0 : index
    %c0_24 = arith.constant 0 : index
    %12 = vector.load %arg2[%c2_21, %c0_22, %c0_23, %c0_24] : memref<3x3x4x8xf32, #tpu.memory_space<vmem>>, vector<1x1x4x8xf32>
    %13 = vector.shape_cast %12 : vector<1x1x4x8xf32> to vector<4x8xf32>
    %c2_25 = arith.constant 2 : index
    %c1_26 = arith.constant 1 : index
    %c0_27 = arith.constant 0 : index
    %c0_28 = arith.constant 0 : index
    %14 = vector.load %arg2[%c2_25, %c1_26, %c0_27, %c0_28] : memref<3x3x4x8xf32, #tpu.memory_space<vmem>>, vector<1x1x4x8xf32>
    %15 = vector.shape_cast %14 : vector<1x1x4x8xf32> to vector<4x8xf32>
    %c2_29 = arith.constant 2 : index
    %c2_30 = arith.constant 2 : index
    %c0_31 = arith.constant 0 : index
    %c0_32 = arith.constant 0 : index
    %16 = vector.load %arg2[%c2_29, %c2_30, %c0_31, %c0_32] : memref<3x3x4x8xf32, #tpu.memory_space<vmem>>, vector<1x1x4x8xf32>
    %17 = vector.shape_cast %16 : vector<1x1x4x8xf32> to vector<4x8xf32>
    %c0_33 = arith.constant 0 : index
    %c0_34 = arith.constant 0 : index
    %c0_35 = arith.constant 0 : index
    %c0_36 = arith.constant 0 : index
    %18 = vector.load %arg4[%c0_33, %c0_34, %c0_35, %c0_36] : memref<3x3x8x8xf32, #tpu.memory_space<vmem>>, vector<1x1x8x8xf32>
    %19 = vector.shape_cast %18 : vector<1x1x8x8xf32> to vector<8x8xf32>
    %c0_37 = arith.constant 0 : index
    %c1_38 = arith.constant 1 : index
    %c0_39 = arith.constant 0 : index
    %c0_40 = arith.constant 0 : index
    %20 = vector.load %arg4[%c0_37, %c1_38, %c0_39, %c0_40] : memref<3x3x8x8xf32, #tpu.memory_space<vmem>>, vector<1x1x8x8xf32>
    %21 = vector.shape_cast %20 : vector<1x1x8x8xf32> to vector<8x8xf32>
    %c0_41 = arith.constant 0 : index
    %c2_42 = arith.constant 2 : index
    %c0_43 = arith.constant 0 : index
    %c0_44 = arith.constant 0 : index
    %22 = vector.load %arg4[%c0_41, %c2_42, %c0_43, %c0_44] : memref<3x3x8x8xf32, #tpu.memory_space<vmem>>, vector<1x1x8x8xf32>
    %23 = vector.shape_cast %22 : vector<1x1x8x8xf32> to vector<8x8xf32>
    %c1_45 = arith.constant 1 : index
    %c0_46 = arith.constant 0 : index
    %c0_47 = arith.constant 0 : index
    %c0_48 = arith.constant 0 : index
    %24 = vector.load %arg4[%c1_45, %c0_46, %c0_47, %c0_48] : memref<3x3x8x8xf32, #tpu.memory_space<vmem>>, vector<1x1x8x8xf32>
    %25 = vector.shape_cast %24 : vector<1x1x8x8xf32> to vector<8x8xf32>
    %c1_49 = arith.constant 1 : index
    %c1_50 = arith.constant 1 : index
    %c0_51 = arith.constant 0 : index
    %c0_52 = arith.constant 0 : index
    %26 = vector.load %arg4[%c1_49, %c1_50, %c0_51, %c0_52] : memref<3x3x8x8xf32, #tpu.memory_space<vmem>>, vector<1x1x8x8xf32>
    %27 = vector.shape_cast %26 : vector<1x1x8x8xf32> to vector<8x8xf32>
    %c1_53 = arith.constant 1 : index
    %c2_54 = arith.constant 2 : index
    %c0_55 = arith.constant 0 : index
    %c0_56 = arith.constant 0 : index
    %28 = vector.load %arg4[%c1_53, %c2_54, %c0_55, %c0_56] : memref<3x3x8x8xf32, #tpu.memory_space<vmem>>, vector<1x1x8x8xf32>
    %29 = vector.shape_cast %28 : vector<1x1x8x8xf32> to vector<8x8xf32>
    %c2_57 = arith.constant 2 : index
    %c0_58 = arith.constant 0 : index
    %c0_59 = arith.constant 0 : index
    %c0_60 = arith.constant 0 : index
    %30 = vector.load %arg4[%c2_57, %c0_58, %c0_59, %c0_60] : memref<3x3x8x8xf32, #tpu.memory_space<vmem>>, vector<1x1x8x8xf32>
    %31 = vector.shape_cast %30 : vector<1x1x8x8xf32> to vector<8x8xf32>
    %c2_61 = arith.constant 2 : index
    %c1_62 = arith.constant 1 : index
    %c0_63 = arith.constant 0 : index
    %c0_64 = arith.constant 0 : index
    %32 = vector.load %arg4[%c2_61, %c1_62, %c0_63, %c0_64] : memref<3x3x8x8xf32, #tpu.memory_space<vmem>>, vector<1x1x8x8xf32>
    %33 = vector.shape_cast %32 : vector<1x1x8x8xf32> to vector<8x8xf32>
    %c2_65 = arith.constant 2 : index
    %c2_66 = arith.constant 2 : index
    %c0_67 = arith.constant 0 : index
    %c0_68 = arith.constant 0 : index
    %34 = vector.load %arg4[%c2_65, %c2_66, %c0_67, %c0_68] : memref<3x3x8x8xf32, #tpu.memory_space<vmem>>, vector<1x1x8x8xf32>
    %35 = vector.shape_cast %34 : vector<1x1x8x8xf32> to vector<8x8xf32>
    %c0_69 = arith.constant 0 : index
    %c0_70 = arith.constant 0 : index
    %36 = vector.load %arg3[%c0_69, %c0_70] : memref<1x8xf32, #tpu.memory_space<vmem>>, vector<1x8xf32>
    %37 = vector.shape_cast %36 : vector<1x8xf32> to vector<1x8xf32>
    %38 = vector.broadcast %37 : vector<1x8xf32> to vector<18x8xf32>
    %c0_71 = arith.constant 0 : index
    %c0_72 = arith.constant 0 : index
    %39 = vector.load %arg5[%c0_71, %c0_72] : memref<1x8xf32, #tpu.memory_space<vmem>>, vector<1x8xf32>
    %40 = vector.shape_cast %39 : vector<1x8xf32> to vector<1x8xf32>
    %41 = vector.broadcast %40 : vector<1x8xf32> to vector<16x8xf32>
    %42 = tpu.iota {dimensions = array<i32: 0>} : vector<18x1xi32>
    %c1_i32 = arith.constant 1 : i32
    %43 = vector.broadcast %c1_i32 : i32 to vector<18x1xi32>
    %44 = arith.cmpi sge, %42, %43 : vector<18x1xi32>
    %c16_i32 = arith.constant 16 : i32
    %45 = vector.broadcast %c16_i32 : i32 to vector<18x1xi32>
    %46 = arith.cmpi sle, %42, %45 : vector<18x1xi32>
    %47 = arith.andi %44, %46 : vector<18x1xi1>
    %48 = vector.shape_cast %47 : vector<18x1xi1> to vector<18x1xi1>
    %49 = vector.broadcast %48 : vector<18x1xi1> to vector<18x8xi1>
    %cst = arith.constant 0.000000e+00 : f32
    %50 = vector.broadcast %cst : f32 to vector<18x8xf32>
    %c0_73 = arith.constant 0 : index
    %c0_74 = arith.constant 0 : index
    %c0_75 = arith.constant 0 : index
    %51 = vector.load %arg7[%c0_73, %c0_74, %c0_75] : memref<18x18x8xf32, #tpu.memory_space<vmem>>, vector<1x18x8xf32>
    %52 = vector.shape_cast %51 : vector<1x18x8xf32> to vector<18x8xf32>
    %53 = vector.shape_cast %50 : vector<18x8xf32> to vector<1x18x8xf32>
    tpu.vector_store %arg7[%c0_73, %c0_74, %c0_75], %53 {strides = array<i32>} : memref<18x18x8xf32, #tpu.memory_space<vmem>>, vector<1x18x8xf32>,
    %c17 = arith.constant 17 : index
    %c0_76 = arith.constant 0 : index
    %c0_77 = arith.constant 0 : index
    %54 = vector.load %arg7[%c17, %c0_76, %c0_77] : memref<18x18x8xf32, #tpu.memory_space<vmem>>, vector<1x18x8xf32>
    %55 = vector.shape_cast %54 : vector<1x18x8xf32> to vector<18x8xf32>
    %56 = vector.shape_cast %50 : vector<18x8xf32> to vector<1x18x8xf32>
    tpu.vector_store %arg7[%c17, %c0_76, %c0_77], %56 {strides = array<i32>} : memref<18x18x8xf32, #tpu.memory_space<vmem>>, vector<1x18x8xf32>,
    %c0_i32 = arith.constant 0 : i32
    %c16_i32_78 = arith.constant 16 : i32
    %57 = arith.addi %c0_i32, %c16_i32_78 : i32
    %c1_i32_79 = arith.constant 1 : i32
    scf.for %arg8 = %c0_i32 to %57 step %c1_i32_79  : i32 {
      %c0_i32_85 = arith.constant 0 : i32
      %59 = arith.addi %arg8, %c0_i32_85 : i32
      %c0_86 = arith.constant 0 : index
      %60 = arith.index_cast %59 : i32 to index
      %c0_87 = arith.constant 0 : index
      %c0_88 = arith.constant 0 : index
      %61 = vector.load %arg1[%c0_86, %60, %c0_87, %c0_88] : memref<1x18x20x4xf32, #tpu.memory_space<vmem>>, vector<1x1x20x4xf32>
      %62 = vector.shape_cast %61 : vector<1x1x20x4xf32> to vector<20x4xf32>
      %63 = vector.extract_strided_slice %62 {offsets = [0, 0], sizes = [18, 4], strides = [1, 1]} : vector<20x4xf32> to vector<18x4xf32>
      %cst_89 = arith.constant dense<0.000000e+00> : vector<18x8xf32>
      %64 = tpu.matmul %63, %1, %cst_89 {dimension_numbers = #tpu.dot_dimension_numbers<[1], [0], [0], [1], [0, 0, 1, 1], [], []>} : vector<18x4xf32>, vector<4x8xf32>, vector<18x8xf32> -> vector<18x8xf32>
      %65 = arith.addf %38, %64 : vector<18x8xf32>
      %66 = vector.extract_strided_slice %62 {offsets = [1, 0], sizes = [18, 4], strides = [1, 1]} : vector<20x4xf32> to vector<18x4xf32>
      %cst_90 = arith.constant dense<0.000000e+00> : vector<18x8xf32>
      %67 = tpu.matmul %66, %3, %cst_90 {dimension_numbers = #tpu.dot_dimension_numbers<[1], [0], [0], [1], [0, 0, 1, 1], [], []>} : vector<18x4xf32>, vector<4x8xf32>, vector<18x8xf32> -> vector<18x8xf32>
      %68 = arith.addf %65, %67 : vector<18x8xf32>
      %69 = vector.extract_strided_slice %62 {offsets = [2, 0], sizes = [18, 4], strides = [1, 1]} : vector<20x4xf32> to vector<18x4xf32>
      %cst_91 = arith.constant dense<0.000000e+00> : vector<18x8xf32>
      %70 = tpu.matmul %69, %5, %cst_91 {dimension_numbers = #tpu.dot_dimension_numbers<[1], [0], [0], [1], [0, 0, 1, 1], [], []>} : vector<18x4xf32>, vector<4x8xf32>, vector<18x8xf32> -> vector<18x8xf32>
      %71 = arith.addf %68, %70 : vector<18x8xf32>
      %c1_i32_92 = arith.constant 1 : i32
      %72 = arith.addi %arg8, %c1_i32_92 : i32
      %c0_93 = arith.constant 0 : index
      %73 = arith.index_cast %72 : i32 to index
      %c0_94 = arith.constant 0 : index
      %c0_95 = arith.constant 0 : index
      %74 = vector.load %arg1[%c0_93, %73, %c0_94, %c0_95] : memref<1x18x20x4xf32, #tpu.memory_space<vmem>>, vector<1x1x20x4xf32>
      %75 = vector.shape_cast %74 : vector<1x1x20x4xf32> to vector<20x4xf32>
      %76 = vector.extract_strided_slice %75 {offsets = [0, 0], sizes = [18, 4], strides = [1, 1]} : vector<20x4xf32> to vector<18x4xf32>
      %cst_96 = arith.constant dense<0.000000e+00> : vector<18x8xf32>
      %77 = tpu.matmul %76, %7, %cst_96 {dimension_numbers = #tpu.dot_dimension_numbers<[1], [0], [0], [1], [0, 0, 1, 1], [], []>} : vector<18x4xf32>, vector<4x8xf32>, vector<18x8xf32> -> vector<18x8xf32>
      %78 = arith.addf %71, %77 : vector<18x8xf32>
      %79 = vector.extract_strided_slice %75 {offsets = [1, 0], sizes = [18, 4], strides = [1, 1]} : vector<20x4xf32> to vector<18x4xf32>
      %cst_97 = arith.constant dense<0.000000e+00> : vector<18x8xf32>
      %80 = tpu.matmul %79, %9, %cst_97 {dimension_numbers = #tpu.dot_dimension_numbers<[1], [0], [0], [1], [0, 0, 1, 1], [], []>} : vector<18x4xf32>, vector<4x8xf32>, vector<18x8xf32> -> vector<18x8xf32>
      %81 = arith.addf %78, %80 : vector<18x8xf32>
      %82 = vector.extract_strided_slice %75 {offsets = [2, 0], sizes = [18, 4], strides = [1, 1]} : vector<20x4xf32> to vector<18x4xf32>
      %cst_98 = arith.constant dense<0.000000e+00> : vector<18x8xf32>
      %83 = tpu.matmul %82, %11, %cst_98 {dimension_numbers = #tpu.dot_dimension_numbers<[1], [0], [0], [1], [0, 0, 1, 1], [], []>} : vector<18x4xf32>, vector<4x8xf32>, vector<18x8xf32> -> vector<18x8xf32>
      %84 = arith.addf %81, %83 : vector<18x8xf32>
      %c2_i32 = arith.constant 2 : i32
      %85 = arith.addi %arg8, %c2_i32 : i32
      %c0_99 = arith.constant 0 : index
      %86 = arith.index_cast %85 : i32 to index
      %c0_100 = arith.constant 0 : index
      %c0_101 = arith.constant 0 : index
      %87 = vector.load %arg1[%c0_99, %86, %c0_100, %c0_101] : memref<1x18x20x4xf32, #tpu.memory_space<vmem>>, vector<1x1x20x4xf32>
      %88 = vector.shape_cast %87 : vector<1x1x20x4xf32> to vector<20x4xf32>
      %89 = vector.extract_strided_slice %88 {offsets = [0, 0], sizes = [18, 4], strides = [1, 1]} : vector<20x4xf32> to vector<18x4xf32>
      %cst_102 = arith.constant dense<0.000000e+00> : vector<18x8xf32>
      %90 = tpu.matmul %89, %13, %cst_102 {dimension_numbers = #tpu.dot_dimension_numbers<[1], [0], [0], [1], [0, 0, 1, 1], [], []>} : vector<18x4xf32>, vector<4x8xf32>, vector<18x8xf32> -> vector<18x8xf32>
      %91 = arith.addf %84, %90 : vector<18x8xf32>
      %92 = vector.extract_strided_slice %88 {offsets = [1, 0], sizes = [18, 4], strides = [1, 1]} : vector<20x4xf32> to vector<18x4xf32>
      %cst_103 = arith.constant dense<0.000000e+00> : vector<18x8xf32>
      %93 = tpu.matmul %92, %15, %cst_103 {dimension_numbers = #tpu.dot_dimension_numbers<[1], [0], [0], [1], [0, 0, 1, 1], [], []>} : vector<18x4xf32>, vector<4x8xf32>, vector<18x8xf32> -> vector<18x8xf32>
      %94 = arith.addf %91, %93 : vector<18x8xf32>
      %95 = vector.extract_strided_slice %88 {offsets = [2, 0], sizes = [18, 4], strides = [1, 1]} : vector<20x4xf32> to vector<18x4xf32>
      %cst_104 = arith.constant dense<0.000000e+00> : vector<18x8xf32>
      %96 = tpu.matmul %95, %17, %cst_104 {dimension_numbers = #tpu.dot_dimension_numbers<[1], [0], [0], [1], [0, 0, 1, 1], [], []>} : vector<18x4xf32>, vector<4x8xf32>, vector<18x8xf32> -> vector<18x8xf32>
      %97 = arith.addf %94, %96 : vector<18x8xf32>
      %cst_105 = arith.constant 0.000000e+00 : f32
      %98 = vector.broadcast %cst_105 : f32 to vector<18x8xf32>
      %99 = arith.maximumf %97, %98 : vector<18x8xf32>
      %cst_106 = arith.constant 0.000000e+00 : f32
      %100 = vector.broadcast %cst_106 : f32 to vector<18x8xf32>
      %101 = arith.select %49, %99, %100 : vector<18x8xi1>, vector<18x8xf32>
      %c1_i32_107 = arith.constant 1 : i32
      %102 = arith.addi %arg8, %c1_i32_107 : i32
      %103 = arith.index_cast %102 : i32 to index
      %c0_108 = arith.constant 0 : index
      %c0_109 = arith.constant 0 : index
      %104 = vector.load %arg7[%103, %c0_108, %c0_109] : memref<18x18x8xf32, #tpu.memory_space<vmem>>, vector<1x18x8xf32>
      %105 = vector.shape_cast %104 : vector<1x18x8xf32> to vector<18x8xf32>
      %106 = vector.shape_cast %101 : vector<18x8xf32> to vector<1x18x8xf32>
      tpu.vector_store %arg7[%103, %c0_108, %c0_109], %106 {strides = array<i32>} : memref<18x18x8xf32, #tpu.memory_space<vmem>>, vector<1x18x8xf32>,
    }
    %c16_i32_80 = arith.constant 16 : i32
    %c0_i32_81 = arith.constant 0 : i32
    %c16_i32_82 = arith.constant 16 : i32
    %58 = arith.addi %c0_i32_81, %c16_i32_82 : i32
    %c1_i32_83 = arith.constant 1 : i32
    scf.for %arg8 = %c0_i32_81 to %58 step %c1_i32_83  : i32 {
      %c0_i32_85 = arith.constant 0 : i32
      %59 = arith.addi %arg8, %c0_i32_85 : i32
      %60 = arith.index_cast %59 : i32 to index
      %c0_86 = arith.constant 0 : index
      %c0_87 = arith.constant 0 : index
      %61 = vector.load %arg7[%60, %c0_86, %c0_87] : memref<18x18x8xf32, #tpu.memory_space<vmem>>, vector<1x18x8xf32>
      %62 = vector.shape_cast %61 : vector<1x18x8xf32> to vector<18x8xf32>
      %63 = vector.extract_strided_slice %62 {offsets = [0, 0], sizes = [16, 8], strides = [1, 1]} : vector<18x8xf32> to vector<16x8xf32>
      %cst_88 = arith.constant dense<0.000000e+00> : vector<16x8xf32>
      %64 = tpu.matmul %63, %19, %cst_88 {dimension_numbers = #tpu.dot_dimension_numbers<[1], [0], [0], [1], [0, 0, 1, 1], [], []>} : vector<16x8xf32>, vector<8x8xf32>, vector<16x8xf32> -> vector<16x8xf32>
      %65 = arith.addf %41, %64 : vector<16x8xf32>
      %66 = vector.extract_strided_slice %62 {offsets = [1, 0], sizes = [16, 8], strides = [1, 1]} : vector<18x8xf32> to vector<16x8xf32>
      %cst_89 = arith.constant dense<0.000000e+00> : vector<16x8xf32>
      %67 = tpu.matmul %66, %21, %cst_89 {dimension_numbers = #tpu.dot_dimension_numbers<[1], [0], [0], [1], [0, 0, 1, 1], [], []>} : vector<16x8xf32>, vector<8x8xf32>, vector<16x8xf32> -> vector<16x8xf32>
      %68 = arith.addf %65, %67 : vector<16x8xf32>
      %69 = vector.extract_strided_slice %62 {offsets = [2, 0], sizes = [16, 8], strides = [1, 1]} : vector<18x8xf32> to vector<16x8xf32>
      %cst_90 = arith.constant dense<0.000000e+00> : vector<16x8xf32>
      %70 = tpu.matmul %69, %23, %cst_90 {dimension_numbers = #tpu.dot_dimension_numbers<[1], [0], [0], [1], [0, 0, 1, 1], [], []>} : vector<16x8xf32>, vector<8x8xf32>, vector<16x8xf32> -> vector<16x8xf32>
      %71 = arith.addf %68, %70 : vector<16x8xf32>
      %c1_i32_91 = arith.constant 1 : i32
      %72 = arith.addi %arg8, %c1_i32_91 : i32
      %73 = arith.index_cast %72 : i32 to index
      %c0_92 = arith.constant 0 : index
      %c0_93 = arith.constant 0 : index
      %74 = vector.load %arg7[%73, %c0_92, %c0_93] : memref<18x18x8xf32, #tpu.memory_space<vmem>>, vector<1x18x8xf32>
      %75 = vector.shape_cast %74 : vector<1x18x8xf32> to vector<18x8xf32>
      %76 = vector.extract_strided_slice %75 {offsets = [0, 0], sizes = [16, 8], strides = [1, 1]} : vector<18x8xf32> to vector<16x8xf32>
      %cst_94 = arith.constant dense<0.000000e+00> : vector<16x8xf32>
      %77 = tpu.matmul %76, %25, %cst_94 {dimension_numbers = #tpu.dot_dimension_numbers<[1], [0], [0], [1], [0, 0, 1, 1], [], []>} : vector<16x8xf32>, vector<8x8xf32>, vector<16x8xf32> -> vector<16x8xf32>
      %78 = arith.addf %71, %77 : vector<16x8xf32>
      %79 = vector.extract_strided_slice %75 {offsets = [1, 0], sizes = [16, 8], strides = [1, 1]} : vector<18x8xf32> to vector<16x8xf32>
      %cst_95 = arith.constant dense<0.000000e+00> : vector<16x8xf32>
      %80 = tpu.matmul %79, %27, %cst_95 {dimension_numbers = #tpu.dot_dimension_numbers<[1], [0], [0], [1], [0, 0, 1, 1], [], []>} : vector<16x8xf32>, vector<8x8xf32>, vector<16x8xf32> -> vector<16x8xf32>
      %81 = arith.addf %78, %80 : vector<16x8xf32>
      %82 = vector.extract_strided_slice %75 {offsets = [2, 0], sizes = [16, 8], strides = [1, 1]} : vector<18x8xf32> to vector<16x8xf32>
      %cst_96 = arith.constant dense<0.000000e+00> : vector<16x8xf32>
      %83 = tpu.matmul %82, %29, %cst_96 {dimension_numbers = #tpu.dot_dimension_numbers<[1], [0], [0], [1], [0, 0, 1, 1], [], []>} : vector<16x8xf32>, vector<8x8xf32>, vector<16x8xf32> -> vector<16x8xf32>
      %84 = arith.addf %81, %83 : vector<16x8xf32>
      %c2_i32 = arith.constant 2 : i32
      %85 = arith.addi %arg8, %c2_i32 : i32
      %86 = arith.index_cast %85 : i32 to index
      %c0_97 = arith.constant 0 : index
      %c0_98 = arith.constant 0 : index
      %87 = vector.load %arg7[%86, %c0_97, %c0_98] : memref<18x18x8xf32, #tpu.memory_space<vmem>>, vector<1x18x8xf32>
      %88 = vector.shape_cast %87 : vector<1x18x8xf32> to vector<18x8xf32>
      %89 = vector.extract_strided_slice %88 {offsets = [0, 0], sizes = [16, 8], strides = [1, 1]} : vector<18x8xf32> to vector<16x8xf32>
      %cst_99 = arith.constant dense<0.000000e+00> : vector<16x8xf32>
      %90 = tpu.matmul %89, %31, %cst_99 {dimension_numbers = #tpu.dot_dimension_numbers<[1], [0], [0], [1], [0, 0, 1, 1], [], []>} : vector<16x8xf32>, vector<8x8xf32>, vector<16x8xf32> -> vector<16x8xf32>
      %91 = arith.addf %84, %90 : vector<16x8xf32>
      %92 = vector.extract_strided_slice %88 {offsets = [1, 0], sizes = [16, 8], strides = [1, 1]} : vector<18x8xf32> to vector<16x8xf32>
      %cst_100 = arith.constant dense<0.000000e+00> : vector<16x8xf32>
      %93 = tpu.matmul %92, %33, %cst_100 {dimension_numbers = #tpu.dot_dimension_numbers<[1], [0], [0], [1], [0, 0, 1, 1], [], []>} : vector<16x8xf32>, vector<8x8xf32>, vector<16x8xf32> -> vector<16x8xf32>
      %94 = arith.addf %91, %93 : vector<16x8xf32>
      %95 = vector.extract_strided_slice %88 {offsets = [2, 0], sizes = [16, 8], strides = [1, 1]} : vector<18x8xf32> to vector<16x8xf32>
      %cst_101 = arith.constant dense<0.000000e+00> : vector<16x8xf32>
      %96 = tpu.matmul %95, %35, %cst_101 {dimension_numbers = #tpu.dot_dimension_numbers<[1], [0], [0], [1], [0, 0, 1, 1], [], []>} : vector<16x8xf32>, vector<8x8xf32>, vector<16x8xf32> -> vector<16x8xf32>
      %97 = arith.addf %94, %96 : vector<16x8xf32>
      %cst_102 = arith.constant 0.000000e+00 : f32
      %98 = vector.broadcast %cst_102 : f32 to vector<16x8xf32>
      %99 = arith.maximumf %97, %98 : vector<16x8xf32>
      %c0_103 = arith.constant 0 : index
      %100 = arith.index_cast %arg8 : i32 to index
      %c0_104 = arith.constant 0 : index
      %c0_105 = arith.constant 0 : index
      %101 = vector.load %arg6[%c0_103, %100, %c0_104, %c0_105] : memref<1x16x16x8xf32, #tpu.memory_space<vmem>>, vector<1x1x16x8xf32>
      %102 = vector.shape_cast %101 : vector<1x1x16x8xf32> to vector<16x8xf32>
      %103 = vector.shape_cast %99 : vector<16x8xf32> to vector<1x1x16x8xf32>
      tpu.vector_store %arg6[%c0_103, %100, %c0_104, %c0_105], %103 {strides = array<i32>} : memref<1x16x16x8xf32, #tpu.memory_space<vmem>>, vector<1x1x16x8xf32>,
    }
    %c16_i32_84 = arith.constant 16 : i32
    return
  }
  func.func @transform_0(%arg0: i32) -> (i32, i32, i32, i32) {
    %c0_i32 = arith.constant 0 : i32
    %c0_i32_0 = arith.constant 0 : i32
    %c0_i32_1 = arith.constant 0 : i32
    %c0_i32_2 = arith.constant 0 : i32
    return %arg0, %c0_i32, %c0_i32_0, %c0_i32_1 : i32, i32, i32, i32
  }
  func.func @transform_1(%arg0: i32) -> (i32, i32, i32, i32) {
    %c0_i32 = arith.constant 0 : i32
    %c0_i32_0 = arith.constant 0 : i32
    %c0_i32_1 = arith.constant 0 : i32
    %c0_i32_2 = arith.constant 0 : i32
    %c0_i32_3 = arith.constant 0 : i32
    return %c0_i32, %c0_i32_0, %c0_i32_1, %c0_i32_2 : i32, i32, i32, i32
  }
  func.func @transform_2(%arg0: i32) -> (i32, i32) {
    %c0_i32 = arith.constant 0 : i32
    %c0_i32_0 = arith.constant 0 : i32
    %c0_i32_1 = arith.constant 0 : i32
    return %c0_i32, %c0_i32_0 : i32, i32
  }
  func.func @transform_3(%arg0: i32) -> (i32, i32, i32, i32) {
    %c0_i32 = arith.constant 0 : i32
    %c0_i32_0 = arith.constant 0 : i32
    %c0_i32_1 = arith.constant 0 : i32
    %c0_i32_2 = arith.constant 0 : i32
    %c0_i32_3 = arith.constant 0 : i32
    return %c0_i32, %c0_i32_0, %c0_i32_1, %c0_i32_2 : i32, i32, i32, i32
  }
  func.func @transform_4(%arg0: i32) -> (i32, i32) {
    %c0_i32 = arith.constant 0 : i32
    %c0_i32_0 = arith.constant 0 : i32
    %c0_i32_1 = arith.constant 0 : i32
    return %c0_i32, %c0_i32_0 : i32, i32
  }
  func.func @transform_5(%arg0: i32) -> (i32, i32, i32, i32) {
    %c0_i32 = arith.constant 0 : i32
    %c0_i32_0 = arith.constant 0 : i32
    %c0_i32_1 = arith.constant 0 : i32
    %c0_i32_2 = arith.constant 0 : i32
    return %arg0, %c0_i32, %c0_i32_0, %c0_i32_1 : i32, i32, i32, i32
  }
}

</mosaic_0001>

<llo_original>
// kernel: double_convolution.1
$region0: #{double_convolution.1}
  #allocation0 [shape = 'u32[]', space=smem, size = 0x4, offset = 0x4, fixed_abs, tag = 'smem constant byte address 0x4 - core index']
  #allocation1 [shape = 'u32[144,128]{1,0:T(1,128)}', space=vmem, size = 0x12000, scoped, tag = 'internal scratch']
  #allocation2 [shape = 'f32[18,18,8]{2,1,0:T(8,128)}', space=vmem, size = 0x36000, scoped, tag = 'scratch operand']
  %s0 = inlined_call_operand.vmem [shape: f32[2,18,20,4], index: 0, kind: input, shape index: {}]
  %s1 = inlined_call_operand.vmem [shape: f32[3,3,4,8], index: 1, kind: input, shape index: {}]
  %s2 = inlined_call_operand.vmem [shape: f32[1,8], index: 2, kind: input, shape index: {}]
  %s3 = inlined_call_operand.vmem [shape: f32[3,3,8,8], index: 3, kind: input, shape index: {}]
  %s4 = inlined_call_operand.vmem [shape: f32[1,8], index: 4, kind: input, shape index: {}]
  %s5 = inlined_call_operand.vmem [shape: f32[2,16,16,8], index: 5, kind: output, shape index: {}]
  %s6 = sld [smem:[#allocation0]]
  $region67: #{double_convolution.1} parent=0
    _
  %s8 = ssub.s32 1, %s6
  %s9 = scalar_select 0, %s8, %s6
  loop: start=0, step=1, limit=4
  $region2: #{double_convolution.1} parent=0 // loop_pre_header
    _
  $region3: #{double_convolution.1} parent=0 // loop_header
    %s11 = sphi 0, %s15
    %p12 = scmp.ge.s32.totalorder %s11, 4
    %s21 = sphi 0, %s23
    %s24 = sphi 0, %s21
    %s25 = sphi 0, %s24
    %s41 = sphi 0, %s25
    %s45 = sphi 0, %s45
    %s47 = sphi 0, %s45
    %s48 = sphi 0, %s47
    %s62 = sphi 0, %s48
    %s66 = sphi 0, %s66
    %s68 = sphi 0, %s66
    %s69 = sphi 0, %s68
    %s83 = sphi 0, %s69
    %s87 = sphi 0, %s87
    %s89 = sphi 0, %s87
    %s90 = sphi 0, %s89
    %s104 = sphi 0, %s90
    %s108 = sphi 0, %s108
    %s110 = sphi 0, %s108
    %s111 = sphi 0, %s110
    %s125 = sphi 0, %s111
    %s131 = sphi 0, %s133
    %s134 = sphi 0, %s131
    %s135 = sphi 0, %s134
    %s151 = sphi 0, %s135
  $region4: #{double_convolution.1} parent=0 // loop_header_branch
    %14 = sbr.rel (%p12) target = $region8
  $region5: #{double_convolution.1} parent=0 // loop_body
    %s16 = ssub.s32 %s11, 1
    %s17 = ssub.s32 %s11, 2
    %s18 = sadd.s32 %s11, 1
    %s19 = ssub.s32 %s11, %s18
    %p20 = scmp.eq.s32.totalorder %s19, 0
    %s22 = sadd.s32 %s21, 1
    %s23 = scalar_select %p20, %s21, %s22
    %p26 = pneg %p20
    %p27 = scmp.eq.s32.totalorder %s11, 1
    %p28 = por %p26, %p27
    %p29 = scmp.ne.s32.totalorder %s21, %s24
    %p30 = scmp.eq.s32.totalorder %s11, 0
    %p31 = por %p29, %p30
    %p32 = scmp.ne.s32.totalorder %s21, %s24
    %p33 = scmp.eq.s32.totalorder %s16, 1
    %p34 = por %p32, %p33
    %p35 = scmp.ne.s32.totalorder %s24, %s25
    %p36 = scmp.eq.s32.totalorder %s16, 0
    %p37 = por %p35, %p36
    %p38 = scmp.ne.s32.totalorder %s24, %s25
    %p39 = scmp.eq.s32.totalorder %s17, 1
    %p40 = por %p38, %p39
    %p42 = scmp.ne.s32.totalorder %s25, %s41
    %p43 = scmp.eq.s32.totalorder %s17, 0
    %p44 = por %p42, %p43
    %s46 = sadd.s32 %s45, 1
    %p49 = scmp.eq.s32.totalorder %s11, 1
    %p50 = scmp.ne.s32.totalorder %s45, %s47
    %p51 = scmp.eq.s32.totalorder %s11, 0
    %p52 = por %p50, %p51
    %p53 = scmp.ne.s32.totalorder %s45, %s47
    %p54 = scmp.eq.s32.totalorder %s16, 1
    %p55 = por %p53, %p54
    %p56 = scmp.ne.s32.totalorder %s47, %s48
    %p57 = scmp.eq.s32.totalorder %s16, 0
    %p58 = por %p56, %p57
    %p59 = scmp.ne.s32.totalorder %s47, %s48
    %p60 = scmp.eq.s32.totalorder %s17, 1
    %p61 = por %p59, %p60
    %p63 = scmp.ne.s32.totalorder %s48, %s62
    %p64 = scmp.eq.s32.totalorder %s17, 0
    %p65 = por %p63, %p64
    %s67 = sadd.s32 %s66, 1
    %p70 = scmp.eq.s32.totalorder %s11, 1
    %p71 = scmp.ne.s32.totalorder %s66, %s68
    %p72 = scmp.eq.s32.totalorder %s11, 0
    %p73 = por %p71, %p72
    %p74 = scmp.ne.s32.totalorder %s66, %s68
    %p75 = scmp.eq.s32.totalorder %s16, 1
    %p76 = por %p74, %p75
    %p77 = scmp.ne.s32.totalorder %s68, %s69
    %p78 = scmp.eq.s32.totalorder %s16, 0
    %p79 = por %p77, %p78
    %p80 = scmp.ne.s32.totalorder %s68, %s69
    %p81 = scmp.eq.s32.totalorder %s17, 1
    %p82 = por %p80, %p81
    %p84 = scmp.ne.s32.totalorder %s69, %s83
    %p85 = scmp.eq.s32.totalorder %s17, 0
    %p86 = por %p84, %p85
    %s88 = sadd.s32 %s87, 1
    %p91 = scmp.eq.s32.totalorder %s11, 1
    %p92 = scmp.ne.s32.totalorder %s87, %s89
    %p93 = scmp.eq.s32.totalorder %s11, 0
    %p94 = por %p92, %p93
    %p95 = scmp.ne.s32.totalorder %s87, %s89
    %p96 = scmp.eq.s32.totalorder %s16, 1
    %p97 = por %p95, %p96
    %p98 = scmp.ne.s32.totalorder %s89, %s90
    %p99 = scmp.eq.s32.totalorder %s16, 0
    %p100 = por %p98, %p99
    %p101 = scmp.ne.s32.totalorder %s89, %s90
    %p102 = scmp.eq.s32.totalorder %s17, 1
    %p103 = por %p101, %p102
    %p105 = scmp.ne.s32.totalorder %s90, %s104
    %p106 = scmp.eq.s32.totalorder %s17, 0
    %p107 = por %p105, %p106
    %s109 = sadd.s32 %s108, 1
    %p112 = scmp.eq.s32.totalorder %s11, 1
    %p113 = scmp.ne.s32.totalorder %s108, %s110
    %p114 = scmp.eq.s32.totalorder %s11, 0
    %p115 = por %p113, %p114
    %p116 = scmp.ne.s32.totalorder %s108, %s110
    %p117 = scmp.eq.s32.totalorder %s16, 1
    %p118 = por %p116, %p117
    %p119 = scmp.ne.s32.totalorder %s110, %s111
    %p120 = scmp.eq.s32.totalorder %s16, 0
    %p121 = por %p119, %p120
    %p122 = scmp.ne.s32.totalorder %s110, %s111
    %p123 = scmp.eq.s32.totalorder %s17, 1
    %p124 = por %p122, %p123
    %p126 = scmp.ne.s32.totalorder %s111, %s125
    %p127 = scmp.eq.s32.totalorder %s17, 0
    %p128 = por %p126, %p127
    %s129 = ssub.s32 %s11, %s18
    %p130 = scmp.eq.s32.totalorder %s129, 0
    %s132 = sadd.s32 %s131, 1
    %s133 = scalar_select %p130, %s131, %s132
    %p136 = pneg %p130
    %p137 = scmp.eq.s32.totalorder %s11, 1
    %p138 = por %p136, %p137
    %p139 = scmp.ne.s32.totalorder %s131, %s134
    %p140 = scmp.eq.s32.totalorder %s11, 0
    %p141 = por %p139, %p140
    %p142 = scmp.ne.s32.totalorder %s131, %s134
    %p143 = scmp.eq.s32.totalorder %s16, 1
    %p144 = por %p142, %p143
    %p145 = scmp.ne.s32.totalorder %s134, %s135
    %p146 = scmp.eq.s32.totalorder %s16, 0
    %p147 = por %p145, %p146
    %p148 = scmp.ne.s32.totalorder %s134, %s135
    %p149 = scmp.eq.s32.totalorder %s17, 1
    %p150 = por %p148, %p149
    %p152 = scmp.ne.s32.totalorder %s135, %s151
    %p153 = scmp.eq.s32.totalorder %s17, 0
    %p154 = por %p152, %p153
    %p155 = scmp.le.s32.totalorder 1, %s11
    %p156 = scmp.lt.s32.totalorder %s11, 3
    %p157 = pnand %p155, %p156
    %p158 = pneg %p157
    // Predicated region
    $region9: #{double_convolution.1} parent=5 // pred_check
      _
    $region10: #{double_convolution.1} parent=5 // pred_check_branch
      %160 = sbr.rel (%p157) target = $region12
    $region11: #{double_convolution.1} parent=5 // pred_region
      %s161 = ssub.s32 %s11, 1
      // Predicated region
      $region13: #{double_convolution.1} parent=11 // pred_check
        %p162 = pneg %p58
      $region14: #{double_convolution.1} parent=11 // pred_check_branch
        %164 = sbr.rel (%p162) target = $region16
      $region15: #{double_convolution.1} parent=11 // pred_region
        _
      $region16: #{double_convolution.1} parent=11 // pred_fallthru
        _
      // Predicated region
      $region17: #{double_convolution.1} parent=11 // pred_check
        %p165 = pneg %p79
      $region18: #{double_convolution.1} parent=11 // pred_check_branch
        %167 = sbr.rel (%p165) target = $region20
      $region19: #{double_convolution.1} parent=11 // pred_region
        _
      $region20: #{double_convolution.1} parent=11 // pred_fallthru
        _
      // Predicated region
      $region21: #{double_convolution.1} parent=11 // pred_check
        %p168 = pneg %p100
      $region22: #{double_convolution.1} parent=11 // pred_check_branch
        %170 = sbr.rel (%p168) target = $region24
      $region23: #{double_convolution.1} parent=11 // pred_region
        _
      $region24: #{double_convolution.1} parent=11 // pred_fallthru
        _
      // Predicated region
      $region25: #{double_convolution.1} parent=11 // pred_check
        %p171 = pneg %p121
      $region26: #{double_convolution.1} parent=11 // pred_check_branch
        %173 = sbr.rel (%p171) target = $region28
      $region27: #{double_convolution.1} parent=11 // pred_region
        _
      $region28: #{double_convolution.1} parent=11 // pred_fallthru
        _
    $region12: #{double_convolution.1} parent=5 // pred_fallthru
      _
    %p174 = scmp.lt.s32.totalorder %s11, 2
    // Predicated region
    $region29: #{double_convolution.1} parent=5 // pred_check
      %p175 = pneg %p174
    $region30: #{double_convolution.1} parent=5 // pred_check_branch
      %177 = sbr.rel (%p175) target = $region32
    $region31: #{double_convolution.1} parent=5 // pred_region
      // Predicated region
      $region33: #{double_convolution.1} parent=31 // pred_check
        %p178 = pneg %p31
      $region34: #{double_convolution.1} parent=31 // pred_check_branch
        %180 = sbr.rel (%p178) target = $region36
      $region35: #{double_convolution.1} parent=31 // pred_region
        %p181 = scmp.lt.s32.totalorder %s11, 1
        %s182 = scalar_select %p181, %s11, 1
        %s183 = smul.addr %s182, 54
        %s184 = smul.addr %s183, 8
        %s185 = scalar_lea.vmem %s0, %s184
      $region36: #{double_convolution.1} parent=31 // pred_fallthru
        _
    $region32: #{double_convolution.1} parent=5 // pred_fallthru
      _
    %p186 = scmp.le.s32.totalorder 1, %s11
    %p187 = scmp.lt.s32.totalorder %s11, 3
    %p188 = pnand %p186, %p187
    %p189 = pneg %p188
    // Predicated region
    $region37: #{double_convolution.1} parent=5 // pred_check
      _
    $region38: #{double_convolution.1} parent=5 // pred_check_branch
      %191 = sbr.rel (%p188) target = $region40
    $region39: #{double_convolution.1} parent=5 // pred_region
      %s192 = ssub.s32 %s11, 1
      %p193 = scmp.lt.s32.totalorder %s16, 1
      %s194 = scalar_select %p193, %s16, 1
      %s195 = smul.addr %s194, 54
      %s196 = smul.addr %s195, 8
      %s197 = scalar_lea.vmem %s0, %s196
      %p198 = pneg %p37
      %p199 = pneg %p34
      %p200 = pneg %p58
      %p201 = pneg %p55
      %p202 = pneg %p79
      %p203 = pneg %p76
      %p204 = pneg %p100
      %p205 = pneg %p97
      %p206 = pneg %p121
      %p207 = pneg %p118
      %p208 = pneg %p147
      %p209 = pneg %p144
      %p210 = scmp.lt.s32.totalorder %s16, 1
      %s211 = scalar_select %p210, %s16, 1
      %s212 = smul.addr %s211, 32
      %s213 = smul.addr %s212, 8
      %s214 = scalar_lea.vmem %s5, %s213
      %p215 = scmp.lt.s32.totalorder %s16, 1
      %s216 = scalar_select %p215, %s16, 1
      %s217 = smul.addr %s216, 54
      %s218 = smul.addr %s217, 8
      %s219 = scalar_lea.vmem %s0, %s218
      %p220 = scmp.lt.s32.totalorder %s16, 1
      %s221 = scalar_select %p220, %s16, 1
      %s222 = smul.addr %s221, 32
      %s223 = smul.addr %s222, 8
      %s224 = scalar_lea.vmem %s5, %s223
      %v225 = vld [vmem:[%s1] sm:$0xf]
      %s226 = scalar_lea.vmem %s1, 4
      %v227 = vld [vmem:[%s226] sm:$0xf]
      %s228 = scalar_lea.vmem %s1, 8
      %v229 = vld [vmem:[%s228] sm:$0xf]
      %s230 = scalar_lea.vmem %s1, 12
      %v231 = vld [vmem:[%s230] sm:$0xf]
      %s232 = scalar_lea.vmem %s1, 16
      %v233 = vld [vmem:[%s232] sm:$0xf]
      %s234 = scalar_lea.vmem %s1, 20
      %v235 = vld [vmem:[%s234] sm:$0xf]
      %s236 = scalar_lea.vmem %s1, 24
      %v237 = vld [vmem:[%s236] sm:$0xf]
      %s238 = scalar_lea.vmem %s1, 28
      %v239 = vld [vmem:[%s238] sm:$0xf]
      %s240 = scalar_lea.vmem %s1, 32
      %v241 = vld [vmem:[%s240] sm:$0xf]
      %v242 = vld [vmem:[%s3] sm:$0xff]
      %s243 = scalar_lea.vmem %s3, 8
      %v244 = vld [vmem:[%s243] sm:$0xff]
      %s245 = scalar_lea.vmem %s3, 16
      %v246 = vld [vmem:[%s245] sm:$0xff]
      %s247 = scalar_lea.vmem %s3, 24
      %v248 = vld [vmem:[%s247] sm:$0xff]
      %s249 = scalar_lea.vmem %s3, 32
      %v250 = vld [vmem:[%s249] sm:$0xff]
      %s251 = scalar_lea.vmem %s3, 40
      %v252 = vld [vmem:[%s251] sm:$0xff]
      %s253 = scalar_lea.vmem %s3, 48
      %v254 = vld [vmem:[%s253] sm:$0xff]
      %s255 = scalar_lea.vmem %s3, 56
      %v256 = vld [vmem:[%s255] sm:$0xff]
      %s257 = scalar_lea.vmem %s3, 64
      %v258 = vld [vmem:[%s257] sm:$0xff]
      %v259 = vld [vmem:[%s2] sm:$0x1]
      %v261 = vlaneseq
      %v262 = vshrl.u32 %v261, 7
      %v263 = vsub.s32 0, %v262
      %v264 = vrot.slane %v259, %v263
      %v266 = vld [vmem:[%s4] sm:$0x1]
      %v268 = vlaneseq
      %v269 = vshrl.u32 %v268, 7
      %v270 = vsub.s32 0, %v269
      %v271 = vrot.slane %v266, %v270
      %v273 = vlaneseq
      %v274 = vshrl.u32 %v273, 7
      %v275 = vadd.s32 %v274, 8
      %v276 = vadd.s32 %v274, 16
      %vm277 = vcmp.ge.s32.totalorder %v274, 1
      %vm278 = vcmp.ge.s32.totalorder %v275, 1
      %vm279 = vcmp.ge.s32.totalorder %v276, 1
      %vm280 = vcmp.le.s32.totalorder %v274, 16
      %vm281 = vcmp.le.s32.totalorder %v275, 16
      %vm282 = vcmp.le.s32.totalorder %v276, 16
      %vm283 = vmand %vm277, %vm280
      %vm284 = vmand %vm278, %vm281
      %vm285 = vmand %vm279, %vm282
      %v286 = vsel %vm283, 1, 0
      %v287 = vsel %vm284, 1, 0
      %v288 = vsel %vm285, 1, 0
      %vm289 = vcmp.eq.s32.totalorder %v286, 1
      %vm290 = vcmp.eq.s32.totalorder %v287, 1
      %vm291 = vcmp.eq.s32.totalorder %v288, 1
      %vm292 = vcmask 64512
      %293 = vst.msk [vmem:[#allocation2] sm:$0xff] %vm292, 0.0
      %294 = vst.msk [vmem:[#allocation2 + $0x8] sm:$0xff] %vm292, 0.0
      %vm295 = vcmask 58368
      %296 = vst.msk [vmem:[#allocation2 + $0x10] sm:$0x3] %vm295, 0.0
      %s297 = scalar_lea.vmem [#allocation2], 408
      %298 = vst.msk [vmem:[%s297] sm:$0xff] %vm292, 0.0
      %299 = vst.msk [vmem:[%s297 + $0x8] sm:$0xff] %vm292, 0.0
      %300 = vst.msk [vmem:[%s297 + $0x10] sm:$0x3] %vm295, 0.0
      loop: start=0, step=1, limit=16
      $region41: #{double_convolution.1} parent=39 // loop_pre_header
        _
      $region42: #{double_convolution.1} parent=39 // loop_header
        %s302 = sphi 0, %s306
        %p303 = scmp.ge.s32.totalorder %s302, 16
      $region43: #{double_convolution.1} parent=39 // loop_header_branch
        %305 = sbr.rel (%p303) target = $region47
      $region44: #{double_convolution.1} parent=39 // loop_body
        %s307 = smul.u32 %s302, 24
        %s308 = scalar_lea.vmem %s219, %s307
        %v309 = vld [vmem:[%s308] sm:$0xff]
        %v310 = vld [vmem:[%s308 + $0x8] sm:$0xff]
        %v311 = vld [vmem:[%s308 + $0x10] sm:$0xf]
        %vm312 = vcmask 31744
        %v314 = vsel %vm312, %v309, 0
        %v317 = vsel %vm312, %v310, 0
        %v320 = vsel %vm312, %v311, 0
        %vm322 = vcmask 1043456
        %v324 = vsel %vm322, %v225, 0
        %326 = vmatprep.subr.mxu0 0.0
        %327 = vmatpush1.msra.mxu0 %v324
        %328 = vmatprep.subr.mxu0 0.0
        %329 = vmatpush1.msra.mxu0 0.0
        %330 = vmatprep.subr.mxu0 0.0
        %331 = vmatpush1.msra.mxu0 0.0
        %332 = vmatprep.subr.mxu0 0.0
        %333 = vmatpush1.msra.mxu0 0.0
        %334 = vmatprep.subr.mxu0 0.0
        %335 = vmatpush1.msra.mxu0 0.0
        %336 = vmatprep.subr.mxu0 0.0
        %337 = vmatpush1.msra.mxu0 0.0
        %338 = vmatprep.subr.mxu0 0.0
        %339 = vmatpush1.msra.mxu0 0.0
        %340 = vmatprep.subr.mxu0 0.0
        %341 = vmatpush1.msra.mxu0 0.0
        %342 = vmatprep.subr.mxu0 0.0
        %343 = vmatpush1.msra.mxu0 0.0
        %344 = vmatprep.subr.mxu0 0.0
        %345 = vmatpush1.msra.mxu0 0.0
        %346 = vmatprep.subr.mxu0 0.0
        %347 = vmatpush1.msra.mxu0 0.0
        %348 = vmatprep.subr.mxu0 0.0
        %349 = vmatpush1.msra.mxu0 0.0
        %350 = vmatprep.subr.mxu0 0.0
        %351 = vmatpush1.msra.mxu0 0.0
        %352 = vmatprep.subr.mxu0 0.0
        %353 = vmatpush1.msra.mxu0 0.0
        %354 = vmatprep.subr.mxu0 0.0
        %355 = vmatpush1.msra.mxu0 0.0
        %356 = vmatprep.subr.mxu0 0.0
        %357 = vmatpush1.msra.mxu0 0.0
        %358 = vmatprep.subr.mxu0 0.0
        %359 = vmatpush1.msra.mxu0 0.0
        %360 = vmatprep.subr.mxu0 0.0
        %361 = vmatpush1.msra.mxu0 0.0
        %362 = vmatprep.subr.mxu0 0.0
        %363 = vmatpush1.msra.mxu0 0.0
        %364 = vmatprep.subr.mxu0 0.0
        %365 = vmatpush1.msra.mxu0 0.0
        %366 = vmatprep.subr.mxu0 0.0
        %367 = vmatpush1.msra.mxu0 0.0
        %368 = vmatprep.subr.mxu0 0.0
        %369 = vmatpush1.msra.mxu0 0.0
        %370 = vmatprep.subr.mxu0 0.0
        %371 = vmatpush1.msra.mxu0 0.0
        %372 = vmatprep.subr.mxu0 0.0
        %373 = vmatpush1.msra.mxu0 0.0
        %374 = vmatprep.subr.mxu0 0.0
        %375 = vmatpush1.msra.mxu0 0.0
        %376 = vmatprep.subr.mxu0 0.0
        %377 = vmatpush1.msra.mxu0 0.0
        %378 = vmatprep.subr.mxu0 0.0
        %379 = vmatpush1.msra.mxu0 0.0
        %380 = vmatprep.subr.mxu0 0.0
        %381 = vmatpush1.msra.mxu0 0.0
        %382 = vmatprep.subr.mxu0 0.0
        %383 = vmatpush1.msra.mxu0 0.0
        %384 = vmatprep.subr.mxu0 0.0
        %385 = vmatpush1.msra.mxu0 0.0
        %386 = vmatprep.subr.mxu0 0.0
        %387 = vmatpush1.msra.mxu0 0.0
        %388 = vmatprep.subr.mxu0 0.0
        %389 = vmatpush1.msra.mxu0 0.0
        %390 = vmatprep.mubr.f32.mxu0 0.0
        %391 = vmatmul.mubr.f32.gmra.mrb[0].mxu0 %v314
        %v392 = vpop.f32.mrb[0].mxu0
        %v393 = vadd.f32 0.0, %v392
        %v394 = vpop.f32.mrb[0].mxu0
        %395 = vmatprep.mubr.f32.mxu0 0.0
        %396 = vmatmul.mubr.f32.gmra.mrb[0].mxu0 %v317
        %v397 = vpop.f32.mrb[0].mxu0
        %v398 = vadd.f32 0.0, %v397
        %v399 = vpop.f32.mrb[0].mxu0
        %400 = vmatprep.mubr.f32.mxu0 0.0
        %401 = vmatmul.mubr.f32.gmra.mrb[0].mxu0 %v320
        %v402 = vpop.f32.mrb[0].mxu0
        %v403 = vadd.f32 0.0, %v402
        %v404 = vpop.f32.mrb[0].mxu0
        %405 = vdwg.mxu0
        %v406 = vadd.f32 %v264, %v393
        %v407 = vadd.f32 %v264, %v398
        %v408 = vadd.f32 %v264, %v403
        %vm409 = vcmask 1046528
        %v410 = vrot.slane %v309, 1
        %v411 = vrot.slane %v310, 1
        %v412 = vsel %vm409, %v410, %v411
        %v413 = vrot.slane %v311, 1
        %v414 = vsel %vm409, %v411, %v413
        %v415 = vsel %vm312, %v412, 0
        %v417 = vsel %vm312, %v414, 0
        %v419 = vsel %vm312, %v413, 0
        %v422 = vsel %vm322, %v227, 0
        %424 = vmatprep.subr.mxu0 0.0
        %425 = vmatpush1.msra.mxu0 %v422
        %426 = vmatprep.subr.mxu0 0.0
        %427 = vmatpush1.msra.mxu0 0.0
        %428 = vmatprep.subr.mxu0 0.0
        %429 = vmatpush1.msra.mxu0 0.0
        %430 = vmatprep.subr.mxu0 0.0
        %431 = vmatpush1.msra.mxu0 0.0
        %432 = vmatprep.subr.mxu0 0.0
        %433 = vmatpush1.msra.mxu0 0.0
        %434 = vmatprep.subr.mxu0 0.0
        %435 = vmatpush1.msra.mxu0 0.0
        %436 = vmatprep.subr.mxu0 0.0
        %437 = vmatpush1.msra.mxu0 0.0
        %438 = vmatprep.subr.mxu0 0.0
        %439 = vmatpush1.msra.mxu0 0.0
        %440 = vmatprep.subr.mxu0 0.0
        %441 = vmatpush1.msra.mxu0 0.0
        %442 = vmatprep.subr.mxu0 0.0
        %443 = vmatpush1.msra.mxu0 0.0
        %444 = vmatprep.subr.mxu0 0.0
        %445 = vmatpush1.msra.mxu0 0.0
        %446 = vmatprep.subr.mxu0 0.0
        %447 = vmatpush1.msra.mxu0 0.0
        %448 = vmatprep.subr.mxu0 0.0
        %449 = vmatpush1.msra.mxu0 0.0
        %450 = vmatprep.subr.mxu0 0.0
        %451 = vmatpush1.msra.mxu0 0.0
        %452 = vmatprep.subr.mxu0 0.0
        %453 = vmatpush1.msra.mxu0 0.0
        %454 = vmatprep.subr.mxu0 0.0
        %455 = vmatpush1.msra.mxu0 0.0
        %456 = vmatprep.subr.mxu0 0.0
        %457 = vmatpush1.msra.mxu0 0.0
        %458 = vmatprep.subr.mxu0 0.0
        %459 = vmatpush1.msra.mxu0 0.0
        %460 = vmatprep.subr.mxu0 0.0
        %461 = vmatpush1.msra.mxu0 0.0
        %462 = vmatprep.subr.mxu0 0.0
        %463 = vmatpush1.msra.mxu0 0.0
        %464 = vmatprep.subr.mxu0 0.0
        %465 = vmatpush1.msra.mxu0 0.0
        %466 = vmatprep.subr.mxu0 0.0
        %467 = vmatpush1.msra.mxu0 0.0
        %468 = vmatprep.subr.mxu0 0.0
        %469 = vmatpush1.msra.mxu0 0.0
        %470 = vmatprep.subr.mxu0 0.0
        %471 = vmatpush1.msra.mxu0 0.0
        %472 = vmatprep.subr.mxu0 0.0
        %473 = vmatpush1.msra.mxu0 0.0
        %474 = vmatprep.subr.mxu0 0.0
        %475 = vmatpush1.msra.mxu0 0.0
        %476 = vmatprep.subr.mxu0 0.0
        %477 = vmatpush1.msra.mxu0 0.0
        %478 = vmatprep.subr.mxu0 0.0
        %479 = vmatpush1.msra.mxu0 0.0
        %480 = vmatprep.subr.mxu0 0.0
        %481 = vmatpush1.msra.mxu0 0.0
        %482 = vmatprep.subr.mxu0 0.0
        %483 = vmatpush1.msra.mxu0 0.0
        %484 = vmatprep.subr.mxu0 0.0
        %485 = vmatpush1.msra.mxu0 0.0
        %486 = vmatprep.subr.mxu0 0.0
        %487 = vmatpush1.msra.mxu0 0.0
        %488 = vmatprep.mubr.f32.mxu0 0.0
        %489 = vmatmul.mubr.f32.gmra.mrb[0].mxu0 %v415
        %v490 = vpop.f32.mrb[0].mxu0
        %v491 = vadd.f32 0.0, %v490
        %v492 = vpop.f32.mrb[0].mxu0
        %493 = vmatprep.mubr.f32.mxu0 0.0
        %494 = vmatmul.mubr.f32.gmra.mrb[0].mxu0 %v417
        %v495 = vpop.f32.mrb[0].mxu0
        %v496 = vadd.f32 0.0, %v495
        %v497 = vpop.f32.mrb[0].mxu0
        %498 = vmatprep.mubr.f32.mxu0 0.0
        %499 = vmatmul.mubr.f32.gmra.mrb[0].mxu0 %v419
        %v500 = vpop.f32.mrb[0].mxu0
        %v501 = vadd.f32 0.0, %v500
        %v502 = vpop.f32.mrb[0].mxu0
        %503 = vdwg.mxu0
        %v504 = vadd.f32 %v406, %v491
        %v505 = vadd.f32 %v407, %v496
        %v506 = vadd.f32 %v408, %v501
        %vm507 = vcmask 1045504
        %v508 = vrot.slane %v309, 2
        %v509 = vrot.slane %v310, 2
        %v510 = vsel %vm507, %v508, %v509
        %v511 = vrot.slane %v311, 2
        %v512 = vsel %vm507, %v509, %v511
        %v513 = vsel %vm312, %v510, 0
        %v515 = vsel %vm312, %v512, 0
        %v517 = vsel %vm312, %v511, 0
        %v520 = vsel %vm322, %v229, 0
        %522 = vmatprep.subr.mxu0 0.0
        %523 = vmatpush1.msra.mxu0 %v520
        %524 = vmatprep.subr.mxu0 0.0
        %525 = vmatpush1.msra.mxu0 0.0
        %526 = vmatprep.subr.mxu0 0.0
        %527 = vmatpush1.msra.mxu0 0.0
        %528 = vmatprep.subr.mxu0 0.0
        %529 = vmatpush1.msra.mxu0 0.0
        %530 = vmatprep.subr.mxu0 0.0
        %531 = vmatpush1.msra.mxu0 0.0
        %532 = vmatprep.subr.mxu0 0.0
        %533 = vmatpush1.msra.mxu0 0.0
        %534 = vmatprep.subr.mxu0 0.0
        %535 = vmatpush1.msra.mxu0 0.0
        %536 = vmatprep.subr.mxu0 0.0
        %537 = vmatpush1.msra.mxu0 0.0
        %538 = vmatprep.subr.mxu0 0.0
        %539 = vmatpush1.msra.mxu0 0.0
        %540 = vmatprep.subr.mxu0 0.0
        %541 = vmatpush1.msra.mxu0 0.0
        %542 = vmatprep.subr.mxu0 0.0
        %543 = vmatpush1.msra.mxu0 0.0
        %544 = vmatprep.subr.mxu0 0.0
        %545 = vmatpush1.msra.mxu0 0.0
        %546 = vmatprep.subr.mxu0 0.0
        %547 = vmatpush1.msra.mxu0 0.0
        %548 = vmatprep.subr.mxu0 0.0
        %549 = vmatpush1.msra.mxu0 0.0
        %550 = vmatprep.subr.mxu0 0.0
        %551 = vmatpush1.msra.mxu0 0.0
        %552 = vmatprep.subr.mxu0 0.0
        %553 = vmatpush1.msra.mxu0 0.0
        %554 = vmatprep.subr.mxu0 0.0
        %555 = vmatpush1.msra.mxu0 0.0
        %556 = vmatprep.subr.mxu0 0.0
        %557 = vmatpush1.msra.mxu0 0.0
        %558 = vmatprep.subr.mxu0 0.0
        %559 = vmatpush1.msra.mxu0 0.0
        %560 = vmatprep.subr.mxu0 0.0
        %561 = vmatpush1.msra.mxu0 0.0
        %562 = vmatprep.subr.mxu0 0.0
        %563 = vmatpush1.msra.mxu0 0.0
        %564 = vmatprep.subr.mxu0 0.0
        %565 = vmatpush1.msra.mxu0 0.0
        %566 = vmatprep.subr.mxu0 0.0
        %567 = vmatpush1.msra.mxu0 0.0
        %568 = vmatprep.subr.mxu0 0.0
        %569 = vmatpush1.msra.mxu0 0.0
        %570 = vmatprep.subr.mxu0 0.0
        %571 = vmatpush1.msra.mxu0 0.0
        %572 = vmatprep.subr.mxu0 0.0
        %573 = vmatpush1.msra.mxu0 0.0
        %574 = vmatprep.subr.mxu0 0.0
        %575 = vmatpush1.msra.mxu0 0.0
        %576 = vmatprep.subr.mxu0 0.0
        %577 = vmatpush1.msra.mxu0 0.0
        %578 = vmatprep.subr.mxu0 0.0
        %579 = vmatpush1.msra.mxu0 0.0
        %580 = vmatprep.subr.mxu0 0.0
        %581 = vmatpush1.msra.mxu0 0.0
        %582 = vmatprep.subr.mxu0 0.0
        %583 = vmatpush1.msra.mxu0 0.0
        %584 = vmatprep.subr.mxu0 0.0
        %585 = vmatpush1.msra.mxu0 0.0
        %586 = vmatprep.mubr.f32.mxu0 0.0
        %587 = vmatmul.mubr.f32.gmra.mrb[0].mxu0 %v513
        %v588 = vpop.f32.mrb[0].mxu0
        %v589 = vadd.f32 0.0, %v588
        %v590 = vpop.f32.mrb[0].mxu0
        %591 = vmatprep.mubr.f32.mxu0 0.0
        %592 = vmatmul.mubr.f32.gmra.mrb[0].mxu0 %v515
        %v593 = vpop.f32.mrb[0].mxu0
        %v594 = vadd.f32 0.0, %v593
        %v595 = vpop.f32.mrb[0].mxu0
        %596 = vmatprep.mubr.f32.mxu0 0.0
        %597 = vmatmul.mubr.f32.gmra.mrb[0].mxu0 %v517
        %v598 = vpop.f32.mrb[0].mxu0
        %v599 = vadd.f32 0.0, %v598
        %v600 = vpop.f32.mrb[0].mxu0
        %601 = vdwg.mxu0
        %v602 = vadd.f32 %v504, %v589
        %v603 = vadd.f32 %v505, %v594
        %v604 = vadd.f32 %v506, %v599
        %s605 = sadd.s32 %s302, 1
        %s606 = smul.u32 %s605, 24
        %s607 = scalar_lea.vmem %s219, %s606
        %v608 = vld [vmem:[%s607] sm:$0xff]
        %v609 = vld [vmem:[%s607 + $0x8] sm:$0xff]
        %v610 = vld [vmem:[%s607 + $0x10] sm:$0xf]
        %v612 = vsel %vm312, %v608, 0
        %v615 = vsel %vm312, %v609, 0
        %v618 = vsel %vm312, %v610, 0
        %v621 = vsel %vm322, %v231, 0
        %623 = vmatprep.subr.mxu0 0.0
        %624 = vmatpush1.msra.mxu0 %v621
        %625 = vmatprep.subr.mxu0 0.0
        %626 = vmatpush1.msra.mxu0 0.0
        %627 = vmatprep.subr.mxu0 0.0
        %628 = vmatpush1.msra.mxu0 0.0
        %629 = vmatprep.subr.mxu0 0.0
        %630 = vmatpush1.msra.mxu0 0.0
        %631 = vmatprep.subr.mxu0 0.0
        %632 = vmatpush1.msra.mxu0 0.0
        %633 = vmatprep.subr.mxu0 0.0
        %634 = vmatpush1.msra.mxu0 0.0
        %635 = vmatprep.subr.mxu0 0.0
        %636 = vmatpush1.msra.mxu0 0.0
        %637 = vmatprep.subr.mxu0 0.0
        %638 = vmatpush1.msra.mxu0 0.0
        %639 = vmatprep.subr.mxu0 0.0
        %640 = vmatpush1.msra.mxu0 0.0
        %641 = vmatprep.subr.mxu0 0.0
        %642 = vmatpush1.msra.mxu0 0.0
        %643 = vmatprep.subr.mxu0 0.0
        %644 = vmatpush1.msra.mxu0 0.0
        %645 = vmatprep.subr.mxu0 0.0
        %646 = vmatpush1.msra.mxu0 0.0
        %647 = vmatprep.subr.mxu0 0.0
        %648 = vmatpush1.msra.mxu0 0.0
        %649 = vmatprep.subr.mxu0 0.0
        %650 = vmatpush1.msra.mxu0 0.0
        %651 = vmatprep.subr.mxu0 0.0
        %652 = vmatpush1.msra.mxu0 0.0
        %653 = vmatprep.subr.mxu0 0.0
        %654 = vmatpush1.msra.mxu0 0.0
        %655 = vmatprep.subr.mxu0 0.0
        %656 = vmatpush1.msra.mxu0 0.0
        %657 = vmatprep.subr.mxu0 0.0
        %658 = vmatpush1.msra.mxu0 0.0
        %659 = vmatprep.subr.mxu0 0.0
        %660 = vmatpush1.msra.mxu0 0.0
        %661 = vmatprep.subr.mxu0 0.0
        %662 = vmatpush1.msra.mxu0 0.0
        %663 = vmatprep.subr.mxu0 0.0
        %664 = vmatpush1.msra.mxu0 0.0
        %665 = vmatprep.subr.mxu0 0.0
        %666 = vmatpush1.msra.mxu0 0.0
        %667 = vmatprep.subr.mxu0 0.0
        %668 = vmatpush1.msra.mxu0 0.0
        %669 = vmatprep.subr.mxu0 0.0
        %670 = vmatpush1.msra.mxu0 0.0
        %671 = vmatprep.subr.mxu0 0.0
        %672 = vmatpush1.msra.mxu0 0.0
        %673 = vmatprep.subr.mxu0 0.0
        %674 = vmatpush1.msra.mxu0 0.0
        %675 = vmatprep.subr.mxu0 0.0
        %676 = vmatpush1.msra.mxu0 0.0
        %677 = vmatprep.subr.mxu0 0.0
        %678 = vmatpush1.msra.mxu0 0.0
        %679 = vmatprep.subr.mxu0 0.0
        %680 = vmatpush1.msra.mxu0 0.0
        %681 = vmatprep.subr.mxu0 0.0
        %682 = vmatpush1.msra.mxu0 0.0
        %683 = vmatprep.subr.mxu0 0.0
        %684 = vmatpush1.msra.mxu0 0.0
        %685 = vmatprep.subr.mxu0 0.0
        %686 = vmatpush1.msra.mxu0 0.0
        %687 = vmatprep.mubr.f32.mxu0 0.0
        %688 = vmatmul.mubr.f32.gmra.mrb[0].mxu0 %v612
        %v689 = vpop.f32.mrb[0].mxu0
        %v690 = vadd.f32 0.0, %v689
        %v691 = vpop.f32.mrb[0].mxu0
        %692 = vmatprep.mubr.f32.mxu0 0.0
        %693 = vmatmul.mubr.f32.gmra.mrb[0].mxu0 %v615
        %v694 = vpop.f32.mrb[0].mxu0
        %v695 = vadd.f32 0.0, %v694
        %v696 = vpop.f32.mrb[0].mxu0
        %697 = vmatprep.mubr.f32.mxu0 0.0
        %698 = vmatmul.mubr.f32.gmra.mrb[0].mxu0 %v618
        %v699 = vpop.f32.mrb[0].mxu0
        %v700 = vadd.f32 0.0, %v699
        %v701 = vpop.f32.mrb[0].mxu0
        %702 = vdwg.mxu0
        %v703 = vadd.f32 %v602, %v690
        %v704 = vadd.f32 %v603, %v695
        %v705 = vadd.f32 %v604, %v700
        %v706 = vrot.slane %v608, 1
        %v707 = vrot.slane %v609, 1
        %v708 = vsel %vm409, %v706, %v707
        %v709 = vrot.slane %v610, 1
        %v710 = vsel %vm409, %v707, %v709
        %v711 = vsel %vm312, %v708, 0
        %v713 = vsel %vm312, %v710, 0
        %v715 = vsel %vm312, %v709, 0
        %v718 = vsel %vm322, %v233, 0
        %720 = vmatprep.subr.mxu0 0.0
        %721 = vmatpush1.msra.mxu0 %v718
        %722 = vmatprep.subr.mxu0 0.0
        %723 = vmatpush1.msra.mxu0 0.0
        %724 = vmatprep.subr.mxu0 0.0
        %725 = vmatpush1.msra.mxu0 0.0
        %726 = vmatprep.subr.mxu0 0.0
        %727 = vmatpush1.msra.mxu0 0.0
        %728 = vmatprep.subr.mxu0 0.0
        %729 = vmatpush1.msra.mxu0 0.0
        %730 = vmatprep.subr.mxu0 0.0
        %731 = vmatpush1.msra.mxu0 0.0
        %732 = vmatprep.subr.mxu0 0.0
        %733 = vmatpush1.msra.mxu0 0.0
        %734 = vmatprep.subr.mxu0 0.0
        %735 = vmatpush1.msra.mxu0 0.0
        %736 = vmatprep.subr.mxu0 0.0
        %737 = vmatpush1.msra.mxu0 0.0
        %738 = vmatprep.subr.mxu0 0.0
        %739 = vmatpush1.msra.mxu0 0.0
        %740 = vmatprep.subr.mxu0 0.0
        %741 = vmatpush1.msra.mxu0 0.0
        %742 = vmatprep.subr.mxu0 0.0
        %743 = vmatpush1.msra.mxu0 0.0
        %744 = vmatprep.subr.mxu0 0.0
        %745 = vmatpush1.msra.mxu0 0.0
        %746 = vmatprep.subr.mxu0 0.0
        %747 = vmatpush1.msra.mxu0 0.0
        %748 = vmatprep.subr.mxu0 0.0
        %749 = vmatpush1.msra.mxu0 0.0
        %750 = vmatprep.subr.mxu0 0.0
        %751 = vmatpush1.msra.mxu0 0.0
        %752 = vmatprep.subr.mxu0 0.0
        %753 = vmatpush1.msra.mxu0 0.0
        %754 = vmatprep.subr.mxu0 0.0
        %755 = vmatpush1.msra.mxu0 0.0
        %756 = vmatprep.subr.mxu0 0.0
        %757 = vmatpush1.msra.mxu0 0.0
        %758 = vmatprep.subr.mxu0 0.0
        %759 = vmatpush1.msra.mxu0 0.0
        %760 = vmatprep.subr.mxu0 0.0
        %761 = vmatpush1.msra.mxu0 0.0
        %762 = vmatprep.subr.mxu0 0.0
        %763 = vmatpush1.msra.mxu0 0.0
        %764 = vmatprep.subr.mxu0 0.0
        %765 = vmatpush1.msra.mxu0 0.0
        %766 = vmatprep.subr.mxu0 0.0
        %767 = vmatpush1.msra.mxu0 0.0
        %768 = vmatprep.subr.mxu0 0.0
        %769 = vmatpush1.msra.mxu0 0.0
        %770 = vmatprep.subr.mxu0 0.0
        %771 = vmatpush1.msra.mxu0 0.0
        %772 = vmatprep.subr.mxu0 0.0
        %773 = vmatpush1.msra.mxu0 0.0
        %774 = vmatprep.subr.mxu0 0.0
        %775 = vmatpush1.msra.mxu0 0.0
        %776 = vmatprep.subr.mxu0 0.0
        %777 = vmatpush1.msra.mxu0 0.0
        %778 = vmatprep.subr.mxu0 0.0
        %779 = vmatpush1.msra.mxu0 0.0
        %780 = vmatprep.subr.mxu0 0.0
        %781 = vmatpush1.msra.mxu0 0.0
        %782 = vmatprep.subr.mxu0 0.0
        %783 = vmatpush1.msra.mxu0 0.0
        %784 = vmatprep.mubr.f32.mxu0 0.0
        %785 = vmatmul.mubr.f32.gmra.mrb[0].mxu0 %v711
        %v786 = vpop.f32.mrb[0].mxu0
        %v787 = vadd.f32 0.0, %v786
        %v788 = vpop.f32.mrb[0].mxu0
        %789 = vmatprep.mubr.f32.mxu0 0.0
        %790 = vmatmul.mubr.f32.gmra.mrb[0].mxu0 %v713
        %v791 = vpop.f32.mrb[0].mxu0
        %v792 = vadd.f32 0.0, %v791
        %v793 = vpop.f32.mrb[0].mxu0
        %794 = vmatprep.mubr.f32.mxu0 0.0
        %795 = vmatmul.mubr.f32.gmra.mrb[0].mxu0 %v715
        %v796 = vpop.f32.mrb[0].mxu0
        %v797 = vadd.f32 0.0, %v796
        %v798 = vpop.f32.mrb[0].mxu0
        %799 = vdwg.mxu0
        %v800 = vadd.f32 %v703, %v787
        %v801 = vadd.f32 %v704, %v792
        %v802 = vadd.f32 %v705, %v797
        %v803 = vrot.slane %v608, 2
        %v804 = vrot.slane %v609, 2
        %v805 = vsel %vm507, %v803, %v804
        %v806 = vrot.slane %v610, 2
        %v807 = vsel %vm507, %v804, %v806
        %v808 = vsel %vm312, %v805, 0
        %v810 = vsel %vm312, %v807, 0
        %v812 = vsel %vm312, %v806, 0
        %v815 = vsel %vm322, %v235, 0
        %817 = vmatprep.subr.mxu0 0.0
        %818 = vmatpush1.msra.mxu0 %v815
        %819 = vmatprep.subr.mxu0 0.0
        %820 = vmatpush1.msra.mxu0 0.0
        %821 = vmatprep.subr.mxu0 0.0
        %822 = vmatpush1.msra.mxu0 0.0
        %823 = vmatprep.subr.mxu0 0.0
        %824 = vmatpush1.msra.mxu0 0.0
        %825 = vmatprep.subr.mxu0 0.0
        %826 = vmatpush1.msra.mxu0 0.0
        %827 = vmatprep.subr.mxu0 0.0
        %828 = vmatpush1.msra.mxu0 0.0
        %829 = vmatprep.subr.mxu0 0.0
        %830 = vmatpush1.msra.mxu0 0.0
        %831 = vmatprep.subr.mxu0 0.0
        %832 = vmatpush1.msra.mxu0 0.0
        %833 = vmatprep.subr.mxu0 0.0
        %834 = vmatpush1.msra.mxu0 0.0
        %835 = vmatprep.subr.mxu0 0.0
        %836 = vmatpush1.msra.mxu0 0.0
        %837 = vmatprep.subr.mxu0 0.0
        %838 = vmatpush1.msra.mxu0 0.0
        %839 = vmatprep.subr.mxu0 0.0
        %840 = vmatpush1.msra.mxu0 0.0
        %841 = vmatprep.subr.mxu0 0.0
        %842 = vmatpush1.msra.mxu0 0.0
        %843 = vmatprep.subr.mxu0 0.0
        %844 = vmatpush1.msra.mxu0 0.0
        %845 = vmatprep.subr.mxu0 0.0
        %846 = vmatpush1.msra.mxu0 0.0
        %847 = vmatprep.subr.mxu0 0.0
        %848 = vmatpush1.msra.mxu0 0.0
        %849 = vmatprep.subr.mxu0 0.0
        %850 = vmatpush1.msra.mxu0 0.0
        %851 = vmatprep.subr.mxu0 0.0
        %852 = vmatpush1.msra.mxu0 0.0
        %853 = vmatprep.subr.mxu0 0.0
        %854 = vmatpush1.msra.mxu0 0.0
        %855 = vmatprep.subr.mxu0 0.0
        %856 = vmatpush1.msra.mxu0 0.0
        %857 = vmatprep.subr.mxu0 0.0
        %858 = vmatpush1.msra.mxu0 0.0
        %859 = vmatprep.subr.mxu0 0.0
        %860 = vmatpush1.msra.mxu0 0.0
        %861 = vmatprep.subr.mxu0 0.0
        %862 = vmatpush1.msra.mxu0 0.0
        %863 = vmatprep.subr.mxu0 0.0
        %864 = vmatpush1.msra.mxu0 0.0
        %865 = vmatprep.subr.mxu0 0.0
        %866 = vmatpush1.msra.mxu0 0.0
        %867 = vmatprep.subr.mxu0 0.0
        %868 = vmatpush1.msra.mxu0 0.0
        %869 = vmatprep.subr.mxu0 0.0
        %870 = vmatpush1.msra.mxu0 0.0
        %871 = vmatprep.subr.mxu0 0.0
        %872 = vmatpush1.msra.mxu0 0.0
        %873 = vmatprep.subr.mxu0 0.0
        %874 = vmatpush1.msra.mxu0 0.0
        %875 = vmatprep.subr.mxu0 0.0
        %876 = vmatpush1.msra.mxu0 0.0
        %877 = vmatprep.subr.mxu0 0.0
        %878 = vmatpush1.msra.mxu0 0.0
        %879 = vmatprep.subr.mxu0 0.0
        %880 = vmatpush1.msra.mxu0 0.0
        %881 = vmatprep.mubr.f32.mxu0 0.0
        %882 = vmatmul.mubr.f32.gmra.mrb[0].mxu0 %v808
        %v883 = vpop.f32.mrb[0].mxu0
        %v884 = vadd.f32 0.0, %v883
        %v885 = vpop.f32.mrb[0].mxu0
        %886 = vmatprep.mubr.f32.mxu0 0.0
        %887 = vmatmul.mubr.f32.gmra.mrb[0].mxu0 %v810
        %v888 = vpop.f32.mrb[0].mxu0
        %v889 = vadd.f32 0.0, %v888
        %v890 = vpop.f32.mrb[0].mxu0
        %891 = vmatprep.mubr.f32.mxu0 0.0
        %892 = vmatmul.mubr.f32.gmra.mrb[0].mxu0 %v812
        %v893 = vpop.f32.mrb[0].mxu0
        %v894 = vadd.f32 0.0, %v893
        %v895 = vpop.f32.mrb[0].mxu0
        %896 = vdwg.mxu0
        %v897 = vadd.f32 %v800, %v884
        %v898 = vadd.f32 %v801, %v889
        %v899 = vadd.f32 %v802, %v894
        %s900 = sadd.s32 %s302, 2
        %s901 = smul.u32 %s900, 24
        %s902 = scalar_lea.vmem %s219, %s901
        %v903 = vld [vmem:[%s902] sm:$0xff]
        %v904 = vld [vmem:[%s902 + $0x8] sm:$0xff]
        %v905 = vld [vmem:[%s902 + $0x10] sm:$0xf]
        %v907 = vsel %vm312, %v903, 0
        %v910 = vsel %vm312, %v904, 0
        %v913 = vsel %vm312, %v905, 0
        %v916 = vsel %vm322, %v237, 0
        %918 = vmatprep.subr.mxu0 0.0
        %919 = vmatpush1.msra.mxu0 %v916
        %920 = vmatprep.subr.mxu0 0.0
        %921 = vmatpush1.msra.mxu0 0.0
        %922 = vmatprep.subr.mxu0 0.0
        %923 = vmatpush1.msra.mxu0 0.0
        %924 = vmatprep.subr.mxu0 0.0
        %925 = vmatpush1.msra.mxu0 0.0
        %926 = vmatprep.subr.mxu0 0.0
        %927 = vmatpush1.msra.mxu0 0.0
        %928 = vmatprep.subr.mxu0 0.0
        %929 = vmatpush1.msra.mxu0 0.0
        %930 = vmatprep.subr.mxu0 0.0
        %931 = vmatpush1.msra.mxu0 0.0
        %932 = vmatprep.subr.mxu0 0.0
        %933 = vmatpush1.msra.mxu0 0.0
        %934 = vmatprep.subr.mxu0 0.0
        %935 = vmatpush1.msra.mxu0 0.0
        %936 = vmatprep.subr.mxu0 0.0
        %937 = vmatpush1.msra.mxu0 0.0
        %938 = vmatprep.subr.mxu0 0.0
        %939 = vmatpush1.msra.mxu0 0.0
        %940 = vmatprep.subr.mxu0 0.0
        %941 = vmatpush1.msra.mxu0 0.0
        %942 = vmatprep.subr.mxu0 0.0
        %943 = vmatpush1.msra.mxu0 0.0
        %944 = vmatprep.subr.mxu0 0.0
        %945 = vmatpush1.msra.mxu0 0.0
        %946 = vmatprep.subr.mxu0 0.0
        %947 = vmatpush1.msra.mxu0 0.0
        %948 = vmatprep.subr.mxu0 0.0
        %949 = vmatpush1.msra.mxu0 0.0
        %950 = vmatprep.subr.mxu0 0.0
        %951 = vmatpush1.msra.mxu0 0.0
        %952 = vmatprep.subr.mxu0 0.0
        %953 = vmatpush1.msra.mxu0 0.0
        %954 = vmatprep.subr.mxu0 0.0
        %955 = vmatpush1.msra.mxu0 0.0
        %956 = vmatprep.subr.mxu0 0.0
        %957 = vmatpush1.msra.mxu0 0.0
        %958 = vmatprep.subr.mxu0 0.0
        %959 = vmatpush1.msra.mxu0 0.0
        %960 = vmatprep.subr.mxu0 0.0
        %961 = vmatpush1.msra.mxu0 0.0
        %962 = vmatprep.subr.mxu0 0.0
        %963 = vmatpush1.msra.mxu0 0.0
        %964 = vmatprep.subr.mxu0 0.0
        %965 = vmatpush1.msra.mxu0 0.0
        %966 = vmatprep.subr.mxu0 0.0
        %967 = vmatpush1.msra.mxu0 0.0
        %968 = vmatprep.subr.mxu0 0.0
        %969 = vmatpush1.msra.mxu0 0.0
        %970 = vmatprep.subr.mxu0 0.0
        %971 = vmatpush1.msra.mxu0 0.0
        %972 = vmatprep.subr.mxu0 0.0
        %973 = vmatpush1.msra.mxu0 0.0
        %974 = vmatprep.subr.mxu0 0.0
        %975 = vmatpush1.msra.mxu0 0.0
        %976 = vmatprep.subr.mxu0 0.0
        %977 = vmatpush1.msra.mxu0 0.0
        %978 = vmatprep.subr.mxu0 0.0
        %979 = vmatpush1.msra.mxu0 0.0
        %980 = vmatprep.subr.mxu0 0.0
        %981 = vmatpush1.msra.mxu0 0.0
        %982 = vmatprep.mubr.f32.mxu0 0.0
        %983 = vmatmul.mubr.f32.gmra.mrb[0].mxu0 %v907
        %v984 = vpop.f32.mrb[0].mxu0
        %v985 = vadd.f32 0.0, %v984
        %v986 = vpop.f32.mrb[0].mxu0
        %987 = vmatprep.mubr.f32.mxu0 0.0
        %988 = vmatmul.mubr.f32.gmra.mrb[0].mxu0 %v910
        %v989 = vpop.f32.mrb[0].mxu0
        %v990 = vadd.f32 0.0, %v989
        %v991 = vpop.f32.mrb[0].mxu0
        %992 = vmatprep.mubr.f32.mxu0 0.0
        %993 = vmatmul.mubr.f32.gmra.mrb[0].mxu0 %v913
        %v994 = vpop.f32.mrb[0].mxu0
        %v995 = vadd.f32 0.0, %v994
        %v996 = vpop.f32.mrb[0].mxu0
        %997 = vdwg.mxu0
        %v998 = vadd.f32 %v897, %v985
        %v999 = vadd.f32 %v898, %v990
        %v1000 = vadd.f32 %v899, %v995
        %v1001 = vrot.slane %v903, 1
        %v1002 = vrot.slane %v904, 1
        %v1003 = vsel %vm409, %v1001, %v1002
        %v1004 = vrot.slane %v905, 1
        %v1005 = vsel %vm409, %v1002, %v1004
        %v1006 = vsel %vm312, %v1003, 0
        %v1008 = vsel %vm312, %v1005, 0
        %v1010 = vsel %vm312, %v1004, 0
        %v1013 = vsel %vm322, %v239, 0
        %1015 = vmatprep.subr.mxu0 0.0
        %1016 = vmatpush1.msra.mxu0 %v1013
        %1017 = vmatprep.subr.mxu0 0.0
        %1018 = vmatpush1.msra.mxu0 0.0
        %1019 = vmatprep.subr.mxu0 0.0
        %1020 = vmatpush1.msra.mxu0 0.0
        %1021 = vmatprep.subr.mxu0 0.0
        %1022 = vmatpush1.msra.mxu0 0.0
        %1023 = vmatprep.subr.mxu0 0.0
        %1024 = vmatpush1.msra.mxu0 0.0
        %1025 = vmatprep.subr.mxu0 0.0
        %1026 = vmatpush1.msra.mxu0 0.0
        %1027 = vmatprep.subr.mxu0 0.0
        %1028 = vmatpush1.msra.mxu0 0.0
        %1029 = vmatprep.subr.mxu0 0.0
        %1030 = vmatpush1.msra.mxu0 0.0
        %1031 = vmatprep.subr.mxu0 0.0
        %1032 = vmatpush1.msra.mxu0 0.0
        %1033 = vmatprep.subr.mxu0 0.0
        %1034 = vmatpush1.msra.mxu0 0.0
        %1035 = vmatprep.subr.mxu0 0.0
        %1036 = vmatpush1.msra.mxu0 0.0
        %1037 = vmatprep.subr.mxu0 0.0
        %1038 = vmatpush1.msra.mxu0 0.0
        %1039 = vmatprep.subr.mxu0 0.0
        %1040 = vmatpush1.msra.mxu0 0.0
        %1041 = vmatprep.subr.mxu0 0.0
        %1042 = vmatpush1.msra.mxu0 0.0
        %1043 = vmatprep.subr.mxu0 0.0
        %1044 = vmatpush1.msra.mxu0 0.0
        %1045 = vmatprep.subr.mxu0 0.0
        %1046 = vmatpush1.msra.mxu0 0.0
        %1047 = vmatprep.subr.mxu0 0.0
        %1048 = vmatpush1.msra.mxu0 0.0
        %1049 = vmatprep.subr.mxu0 0.0
        %1050 = vmatpush1.msra.mxu0 0.0
        %1051 = vmatprep.subr.mxu0 0.0
        %1052 = vmatpush1.msra.mxu0 0.0
        %1053 = vmatprep.subr.mxu0 0.0
        %1054 = vmatpush1.msra.mxu0 0.0
        %1055 = vmatprep.subr.mxu0 0.0
        %1056 = vmatpush1.msra.mxu0 0.0
        %1057 = vmatprep.subr.mxu0 0.0
        %1058 = vmatpush1.msra.mxu0 0.0
        %1059 = vmatprep.subr.mxu0 0.0
        %1060 = vmatpush1.msra.mxu0 0.0
        %1061 = vmatprep.subr.mxu0 0.0
        %1062 = vmatpush1.msra.mxu0 0.0
        %1063 = vmatprep.subr.mxu0 0.0
        %1064 = vmatpush1.msra.mxu0 0.0
        %1065 = vmatprep.subr.mxu0 0.0
        %1066 = vmatpush1.msra.mxu0 0.0
        %1067 = vmatprep.subr.mxu0 0.0
        %1068 = vmatpush1.msra.mxu0 0.0
        %1069 = vmatprep.subr.mxu0 0.0
        %1070 = vmatpush1.msra.mxu0 0.0
        %1071 = vmatprep.subr.mxu0 0.0
        %1072 = vmatpush1.msra.mxu0 0.0
        %1073 = vmatprep.subr.mxu0 0.0
        %1074 = vmatpush1.msra.mxu0 0.0
        %1075 = vmatprep.subr.mxu0 0.0
        %1076 = vmatpush1.msra.mxu0 0.0
        %1077 = vmatprep.subr.mxu0 0.0
        %1078 = vmatpush1.msra.mxu0 0.0
        %1079 = vmatprep.mubr.f32.mxu0 0.0
        %1080 = vmatmul.mubr.f32.gmra.mrb[0].mxu0 %v1006
        %v1081 = vpop.f32.mrb[0].mxu0
        %v1082 = vadd.f32 0.0, %v1081
        %v1083 = vpop.f32.mrb[0].mxu0
        %1084 = vmatprep.mubr.f32.mxu0 0.0
        %1085 = vmatmul.mubr.f32.gmra.mrb[0].mxu0 %v1008
        %v1086 = vpop.f32.mrb[0].mxu0
        %v1087 = vadd.f32 0.0, %v1086
        %v1088 = vpop.f32.mrb[0].mxu0
        %1089 = vmatprep.mubr.f32.mxu0 0.0
        %1090 = vmatmul.mubr.f32.gmra.mrb[0].mxu0 %v1010
        %v1091 = vpop.f32.mrb[0].mxu0
        %v1092 = vadd.f32 0.0, %v1091
        %v1093 = vpop.f32.mrb[0].mxu0
        %1094 = vdwg.mxu0
        %v1095 = vadd.f32 %v998, %v1082
        %v1096 = vadd.f32 %v999, %v1087
        %v1097 = vadd.f32 %v1000, %v1092
        %v1098 = vrot.slane %v903, 2
        %v1099 = vrot.slane %v904, 2
        %v1100 = vsel %vm507, %v1098, %v1099
        %v1101 = vrot.slane %v905, 2
        %v1102 = vsel %vm507, %v1099, %v1101
        %v1103 = vsel %vm312, %v1100, 0
        %v1105 = vsel %vm312, %v1102, 0
        %v1107 = vsel %vm312, %v1101, 0
        %v1110 = vsel %vm322, %v241, 0
        %1112 = vmatprep.subr.mxu0 0.0
        %1113 = vmatpush1.msra.mxu0 %v1110
        %1114 = vmatprep.subr.mxu0 0.0
        %1115 = vmatpush1.msra.mxu0 0.0
        %1116 = vmatprep.subr.mxu0 0.0
        %1117 = vmatpush1.msra.mxu0 0.0
        %1118 = vmatprep.subr.mxu0 0.0
        %1119 = vmatpush1.msra.mxu0 0.0
        %1120 = vmatprep.subr.mxu0 0.0
        %1121 = vmatpush1.msra.mxu0 0.0
        %1122 = vmatprep.subr.mxu0 0.0
        %1123 = vmatpush1.msra.mxu0 0.0
        %1124 = vmatprep.subr.mxu0 0.0
        %1125 = vmatpush1.msra.mxu0 0.0
        %1126 = vmatprep.subr.mxu0 0.0
        %1127 = vmatpush1.msra.mxu0 0.0
        %1128 = vmatprep.subr.mxu0 0.0
        %1129 = vmatpush1.msra.mxu0 0.0
        %1130 = vmatprep.subr.mxu0 0.0
        %1131 = vmatpush1.msra.mxu0 0.0
        %1132 = vmatprep.subr.mxu0 0.0
        %1133 = vmatpush1.msra.mxu0 0.0
        %1134 = vmatprep.subr.mxu0 0.0
        %1135 = vmatpush1.msra.mxu0 0.0
        %1136 = vmatprep.subr.mxu0 0.0
        %1137 = vmatpush1.msra.mxu0 0.0
        %1138 = vmatprep.subr.mxu0 0.0
        %1139 = vmatpush1.msra.mxu0 0.0
        %1140 = vmatprep.subr.mxu0 0.0
        %1141 = vmatpush1.msra.mxu0 0.0
        %1142 = vmatprep.subr.mxu0 0.0
        %1143 = vmatpush1.msra.mxu0 0.0
        %1144 = vmatprep.subr.mxu0 0.0
        %1145 = vmatpush1.msra.mxu0 0.0
        %1146 = vmatprep.subr.mxu0 0.0
        %1147 = vmatpush1.msra.mxu0 0.0
        %1148 = vmatprep.subr.mxu0 0.0
        %1149 = vmatpush1.msra.mxu0 0.0
        %1150 = vmatprep.subr.mxu0 0.0
        %1151 = vmatpush1.msra.mxu0 0.0
        %1152 = vmatprep.subr.mxu0 0.0
        %1153 = vmatpush1.msra.mxu0 0.0
        %1154 = vmatprep.subr.mxu0 0.0
        %1155 = vmatpush1.msra.mxu0 0.0
        %1156 = vmatprep.subr.mxu0 0.0
        %1157 = vmatpush1.msra.mxu0 0.0
        %1158 = vmatprep.subr.mxu0 0.0
        %1159 = vmatpush1.msra.mxu0 0.0
        %1160 = vmatprep.subr.mxu0 0.0
        %1161 = vmatpush1.msra.mxu0 0.0
        %1162 = vmatprep.subr.mxu0 0.0
        %1163 = vmatpush1.msra.mxu0 0.0
        %1164 = vmatprep.subr.mxu0 0.0
        %1165 = vmatpush1.msra.mxu0 0.0
        %1166 = vmatprep.subr.mxu0 0.0
        %1167 = vmatpush1.msra.mxu0 0.0
        %1168 = vmatprep.subr.mxu0 0.0
        %1169 = vmatpush1.msra.mxu0 0.0
        %1170 = vmatprep.subr.mxu0 0.0
        %1171 = vmatpush1.msra.mxu0 0.0
        %1172 = vmatprep.subr.mxu0 0.0
        %1173 = vmatpush1.msra.mxu0 0.0
        %1174 = vmatprep.subr.mxu0 0.0
        %1175 = vmatpush1.msra.mxu0 0.0
        %1176 = vmatprep.mubr.f32.mxu0 0.0
        %1177 = vmatmul.mubr.f32.gmra.mrb[0].mxu0 %v1103
        %v1178 = vpop.f32.mrb[0].mxu0
        %v1179 = vadd.f32 0.0, %v1178
        %v1180 = vpop.f32.mrb[0].mxu0
        %1181 = vmatprep.mubr.f32.mxu0 0.0
        %1182 = vmatmul.mubr.f32.gmra.mrb[0].mxu0 %v1105
        %v1183 = vpop.f32.mrb[0].mxu0
        %v1184 = vadd.f32 0.0, %v1183
        %v1185 = vpop.f32.mrb[0].mxu0
        %1186 = vmatprep.mubr.f32.mxu0 0.0
        %1187 = vmatmul.mubr.f32.gmra.mrb[0].mxu0 %v1107
        %v1188 = vpop.f32.mrb[0].mxu0
        %v1189 = vadd.f32 0.0, %v1188
        %v1190 = vpop.f32.mrb[0].mxu0
        %1191 = vdwg.mxu0
        %v1192 = vadd.f32 %v1095, %v1179
        %v1193 = vadd.f32 %v1096, %v1184
        %v1194 = vadd.f32 %v1097, %v1189
        %v1195 = vmax.f32 %v1192, 0.0
        %v1196 = vmax.f32 %v1193, 0.0
        %v1197 = vmax.f32 %v1194, 0.0
        %v1198 = vsel %vm289, %v1195, 0.0
        %v1199 = vsel %vm290, %v1196, 0.0
        %v1200 = vsel %vm291, %v1197, 0.0
        %s1201 = scalar_lea.vmem [#allocation2], %s606
        %1202 = vst.msk [vmem:[%s1201] sm:$0xff] %vm292, %v1198
        %1203 = vst.msk [vmem:[%s1201 + $0x8] sm:$0xff] %vm292, %v1199
        %1204 = vst.msk [vmem:[%s1201 + $0x10] sm:$0x3] %vm295, %v1200
      $region45: #{double_convolution.1} parent=39 // loop_footer
        %s306 = sadd.s32 1, %s302
      $region46: #{double_convolution.1} parent=39 // loop_footer_branch
        %301 = sbr.rel target = $region42
      $region47: #{double_convolution.1} parent=39 // loop_exit
        _
      loop: start=0, step=1, limit=16
      $region48: #{double_convolution.1} parent=39 // loop_pre_header
        _
      $region49: #{double_convolution.1} parent=39 // loop_header
        %s1206 = sphi 0, %s1210
        %p1207 = scmp.ge.s32.totalorder %s1206, 16
      $region50: #{double_convolution.1} parent=39 // loop_header_branch
        %1209 = sbr.rel (%p1207) target = $region54
      $region51: #{double_convolution.1} parent=39 // loop_body
        %s1211 = smul.u32 %s1206, 24
        %s1212 = scalar_lea.vmem [#allocation2], %s1211
        %v1213 = vld [vmem:[%s1212] sm:$0xff]
        %v1214 = vld [vmem:[%s1212 + $0x8] sm:$0xff]
        %v1215 = vld [vmem:[%s1212 + $0x10] sm:$0x3]
        %v1217 = vsel %vm292, %v1213, 0
        %v1220 = vsel %vm292, %v1214, 0
        %1222 = vmatprep.subr.mxu0 0.0
        %1223 = vmatpush1.msra.mxu0 %v242
        %1224 = vmatprep.subr.mxu0 0.0
        %1225 = vmatpush1.msra.mxu0 0.0
        %1226 = vmatprep.subr.mxu0 0.0
        %1227 = vmatpush1.msra.mxu0 0.0
        %1228 = vmatprep.subr.mxu0 0.0
        %1229 = vmatpush1.msra.mxu0 0.0
        %1230 = vmatprep.subr.mxu0 0.0
        %1231 = vmatpush1.msra.mxu0 0.0
        %1232 = vmatprep.subr.mxu0 0.0
        %1233 = vmatpush1.msra.mxu0 0.0
        %1234 = vmatprep.subr.mxu0 0.0
        %1235 = vmatpush1.msra.mxu0 0.0
        %1236 = vmatprep.subr.mxu0 0.0
        %1237 = vmatpush1.msra.mxu0 0.0
        %1238 = vmatprep.subr.mxu0 0.0
        %1239 = vmatpush1.msra.mxu0 0.0
        %1240 = vmatprep.subr.mxu0 0.0
        %1241 = vmatpush1.msra.mxu0 0.0
        %1242 = vmatprep.subr.mxu0 0.0
        %1243 = vmatpush1.msra.mxu0 0.0
        %1244 = vmatprep.subr.mxu0 0.0
        %1245 = vmatpush1.msra.mxu0 0.0
        %1246 = vmatprep.subr.mxu0 0.0
        %1247 = vmatpush1.msra.mxu0 0.0
        %1248 = vmatprep.subr.mxu0 0.0
        %1249 = vmatpush1.msra.mxu0 0.0
        %1250 = vmatprep.subr.mxu0 0.0
        %1251 = vmatpush1.msra.mxu0 0.0
        %1252 = vmatprep.subr.mxu0 0.0
        %1253 = vmatpush1.msra.mxu0 0.0
        %1254 = vmatprep.subr.mxu0 0.0
        %1255 = vmatpush1.msra.mxu0 0.0
        %1256 = vmatprep.subr.mxu0 0.0
        %1257 = vmatpush1.msra.mxu0 0.0
        %1258 = vmatprep.subr.mxu0 0.0
        %1259 = vmatpush1.msra.mxu0 0.0
        %1260 = vmatprep.subr.mxu0 0.0
        %1261 = vmatpush1.msra.mxu0 0.0
        %1262 = vmatprep.subr.mxu0 0.0
        %1263 = vmatpush1.msra.mxu0 0.0
        %1264 = vmatprep.subr.mxu0 0.0
        %1265 = vmatpush1.msra.mxu0 0.0
        %1266 = vmatprep.subr.mxu0 0.0
        %1267 = vmatpush1.msra.mxu0 0.0
        %1268 = vmatprep.subr.mxu0 0.0
        %1269 = vmatpush1.msra.mxu0 0.0
        %1270 = vmatprep.subr.mxu0 0.0
        %1271 = vmatpush1.msra.mxu0 0.0
        %1272 = vmatprep.subr.mxu0 0.0
        %1273 = vmatpush1.msra.mxu0 0.0
        %1274 = vmatprep.subr.mxu0 0.0
        %1275 = vmatpush1.msra.mxu0 0.0
        %1276 = vmatprep.subr.mxu0 0.0
        %1277 = vmatpush1.msra.mxu0 0.0
        %1278 = vmatprep.subr.mxu0 0.0
        %1279 = vmatpush1.msra.mxu0 0.0
        %1280 = vmatprep.subr.mxu0 0.0
        %1281 = vmatpush1.msra.mxu0 0.0
        %1282 = vmatprep.subr.mxu0 0.0
        %1283 = vmatpush1.msra.mxu0 0.0
        %1284 = vmatprep.subr.mxu0 0.0
        %1285 = vmatpush1.msra.mxu0 0.0
        %1286 = vmatprep.mubr.f32.mxu0 0.0
        %1287 = vmatmul.mubr.f32.gmra.mrb[0].mxu0 %v1217
        %v1288 = vpop.f32.mrb[0].mxu0
        %v1289 = vadd.f32 0.0, %v1288
        %v1290 = vpop.f32.mrb[0].mxu0
        %1291 = vmatprep.mubr.f32.mxu0 0.0
        %1292 = vmatmul.mubr.f32.gmra.mrb[0].mxu0 %v1220
        %v1293 = vpop.f32.mrb[0].mxu0
        %v1294 = vadd.f32 0.0, %v1293
        %v1295 = vpop.f32.mrb[0].mxu0
        %1296 = vdwg.mxu0
        %v1297 = vadd.f32 %v271, %v1289
        %v1298 = vadd.f32 %v271, %v1294
        %vm1300 = vcmask 1046528
        %v1301 = vrot.slane %v1213, 1
        %v1302 = vrot.slane %v1214, 1
        %v1303 = vsel %vm1300, %v1301, %v1302
        %v1304 = vrot.slane %v1215, 1
        %v1305 = vsel %vm1300, %v1302, %v1304
        %v1306 = vsel %vm292, %v1303, 0
        %v1308 = vsel %vm292, %v1305, 0
        %1310 = vmatprep.subr.mxu0 0.0
        %1311 = vmatpush1.msra.mxu0 %v244
        %1312 = vmatprep.subr.mxu0 0.0
        %1313 = vmatpush1.msra.mxu0 0.0
        %1314 = vmatprep.subr.mxu0 0.0
        %1315 = vmatpush1.msra.mxu0 0.0
        %1316 = vmatprep.subr.mxu0 0.0
        %1317 = vmatpush1.msra.mxu0 0.0
        %1318 = vmatprep.subr.mxu0 0.0
        %1319 = vmatpush1.msra.mxu0 0.0
        %1320 = vmatprep.subr.mxu0 0.0
        %1321 = vmatpush1.msra.mxu0 0.0
        %1322 = vmatprep.subr.mxu0 0.0
        %1323 = vmatpush1.msra.mxu0 0.0
        %1324 = vmatprep.subr.mxu0 0.0
        %1325 = vmatpush1.msra.mxu0 0.0
        %1326 = vmatprep.subr.mxu0 0.0
        %1327 = vmatpush1.msra.mxu0 0.0
        %1328 = vmatprep.subr.mxu0 0.0
        %1329 = vmatpush1.msra.mxu0 0.0
        %1330 = vmatprep.subr.mxu0 0.0
        %1331 = vmatpush1.msra.mxu0 0.0
        %1332 = vmatprep.subr.mxu0 0.0
        %1333 = vmatpush1.msra.mxu0 0.0
        %1334 = vmatprep.subr.mxu0 0.0
        %1335 = vmatpush1.msra.mxu0 0.0
        %1336 = vmatprep.subr.mxu0 0.0
        %1337 = vmatpush1.msra.mxu0 0.0
        %1338 = vmatprep.subr.mxu0 0.0
        %1339 = vmatpush1.msra.mxu0 0.0
        %1340 = vmatprep.subr.mxu0 0.0
        %1341 = vmatpush1.msra.mxu0 0.0
        %1342 = vmatprep.subr.mxu0 0.0
        %1343 = vmatpush1.msra.mxu0 0.0
        %1344 = vmatprep.subr.mxu0 0.0
        %1345 = vmatpush1.msra.mxu0 0.0
        %1346 = vmatprep.subr.mxu0 0.0
        %1347 = vmatpush1.msra.mxu0 0.0
        %1348 = vmatprep.subr.mxu0 0.0
        %1349 = vmatpush1.msra.mxu0 0.0
        %1350 = vmatprep.subr.mxu0 0.0
        %1351 = vmatpush1.msra.mxu0 0.0
        %1352 = vmatprep.subr.mxu0 0.0
        %1353 = vmatpush1.msra.mxu0 0.0
        %1354 = vmatprep.subr.mxu0 0.0
        %1355 = vmatpush1.msra.mxu0 0.0
        %1356 = vmatprep.subr.mxu0 0.0
        %1357 = vmatpush1.msra.mxu0 0.0
        %1358 = vmatprep.subr.mxu0 0.0
        %1359 = vmatpush1.msra.mxu0 0.0
        %1360 = vmatprep.subr.mxu0 0.0
        %1361 = vmatpush1.msra.mxu0 0.0
        %1362 = vmatprep.subr.mxu0 0.0
        %1363 = vmatpush1.msra.mxu0 0.0
        %1364 = vmatprep.subr.mxu0 0.0
        %1365 = vmatpush1.msra.mxu0 0.0
        %1366 = vmatprep.subr.mxu0 0.0
        %1367 = vmatpush1.msra.mxu0 0.0
        %1368 = vmatprep.subr.mxu0 0.0
        %1369 = vmatpush1.msra.mxu0 0.0
        %1370 = vmatprep.subr.mxu0 0.0
        %1371 = vmatpush1.msra.mxu0 0.0
        %1372 = vmatprep.subr.mxu0 0.0
        %1373 = vmatpush1.msra.mxu0 0.0
        %1374 = vmatprep.mubr.f32.mxu0 0.0
        %1375 = vmatmul.mubr.f32.gmra.mrb[0].mxu0 %v1306
        %v1376 = vpop.f32.mrb[0].mxu0
        %v1377 = vadd.f32 0.0, %v1376
        %v1378 = vpop.f32.mrb[0].mxu0
        %1379 = vmatprep.mubr.f32.mxu0 0.0
        %1380 = vmatmul.mubr.f32.gmra.mrb[0].mxu0 %v1308
        %v1381 = vpop.f32.mrb[0].mxu0
        %v1382 = vadd.f32 0.0, %v1381
        %v1383 = vpop.f32.mrb[0].mxu0
        %1384 = vdwg.mxu0
        %v1385 = vadd.f32 %v1297, %v1377
        %v1386 = vadd.f32 %v1298, %v1382
        %vm1387 = vcmask 1045504
        %v1388 = vrot.slane %v1213, 2
        %v1389 = vrot.slane %v1214, 2
        %v1390 = vsel %vm1387, %v1388, %v1389
        %v1391 = vrot.slane %v1215, 2
        %v1392 = vsel %vm1387, %v1389, %v1391
        %v1393 = vsel %vm292, %v1390, 0
        %v1395 = vsel %vm292, %v1392, 0
        %1397 = vmatprep.subr.mxu0 0.0
        %1398 = vmatpush1.msra.mxu0 %v246
        %1399 = vmatprep.subr.mxu0 0.0
        %1400 = vmatpush1.msra.mxu0 0.0
        %1401 = vmatprep.subr.mxu0 0.0
        %1402 = vmatpush1.msra.mxu0 0.0
        %1403 = vmatprep.subr.mxu0 0.0
        %1404 = vmatpush1.msra.mxu0 0.0
        %1405 = vmatprep.subr.mxu0 0.0
        %1406 = vmatpush1.msra.mxu0 0.0
        %1407 = vmatprep.subr.mxu0 0.0
        %1408 = vmatpush1.msra.mxu0 0.0
        %1409 = vmatprep.subr.mxu0 0.0
        %1410 = vmatpush1.msra.mxu0 0.0
        %1411 = vmatprep.subr.mxu0 0.0
        %1412 = vmatpush1.msra.mxu0 0.0
        %1413 = vmatprep.subr.mxu0 0.0
        %1414 = vmatpush1.msra.mxu0 0.0
        %1415 = vmatprep.subr.mxu0 0.0
        %1416 = vmatpush1.msra.mxu0 0.0
        %1417 = vmatprep.subr.mxu0 0.0
        %1418 = vmatpush1.msra.mxu0 0.0
        %1419 = vmatprep.subr.mxu0 0.0
        %1420 = vmatpush1.msra.mxu0 0.0
        %1421 = vmatprep.subr.mxu0 0.0
        %1422 = vmatpush1.msra.mxu0 0.0
        %1423 = vmatprep.subr.mxu0 0.0
        %1424 = vmatpush1.msra.mxu0 0.0
        %1425 = vmatprep.subr.mxu0 0.0
        %1426 = vmatpush1.msra.mxu0 0.0
        %1427 = vmatprep.subr.mxu0 0.0
        %1428 = vmatpush1.msra.mxu0 0.0
        %1429 = vmatprep.subr.mxu0 0.0
        %1430 = vmatpush1.msra.mxu0 0.0
        %1431 = vmatprep.subr.mxu0 0.0
        %1432 = vmatpush1.msra.mxu0 0.0
        %1433 = vmatprep.subr.mxu0 0.0
        %1434 = vmatpush1.msra.mxu0 0.0
        %1435 = vmatprep.subr.mxu0 0.0
        %1436 = vmatpush1.msra.mxu0 0.0
        %1437 = vmatprep.subr.mxu0 0.0
        %1438 = vmatpush1.msra.mxu0 0.0
        %1439 = vmatprep.subr.mxu0 0.0
        %1440 = vmatpush1.msra.mxu0 0.0
        %1441 = vmatprep.subr.mxu0 0.0
        %1442 = vmatpush1.msra.mxu0 0.0
        %1443 = vmatprep.subr.mxu0 0.0
        %1444 = vmatpush1.msra.mxu0 0.0
        %1445 = vmatprep.subr.mxu0 0.0
        %1446 = vmatpush1.msra.mxu0 0.0
        %1447 = vmatprep.subr.mxu0 0.0
        %1448 = vmatpush1.msra.mxu0 0.0
        %1449 = vmatprep.subr.mxu0 0.0
        %1450 = vmatpush1.msra.mxu0 0.0
        %1451 = vmatprep.subr.mxu0 0.0
        %1452 = vmatpush1.msra.mxu0 0.0
        %1453 = vmatprep.subr.mxu0 0.0
        %1454 = vmatpush1.msra.mxu0 0.0
        %1455 = vmatprep.subr.mxu0 0.0
        %1456 = vmatpush1.msra.mxu0 0.0
        %1457 = vmatprep.subr.mxu0 0.0
        %1458 = vmatpush1.msra.mxu0 0.0
        %1459 = vmatprep.subr.mxu0 0.0
        %1460 = vmatpush1.msra.mxu0 0.0
        %1461 = vmatprep.mubr.f32.mxu0 0.0
        %1462 = vmatmul.mubr.f32.gmra.mrb[0].mxu0 %v1393
        %v1463 = vpop.f32.mrb[0].mxu0
        %v1464 = vadd.f32 0.0, %v1463
        %v1465 = vpop.f32.mrb[0].mxu0
        %1466 = vmatprep.mubr.f32.mxu0 0.0
        %1467 = vmatmul.mubr.f32.gmra.mrb[0].mxu0 %v1395
        %v1468 = vpop.f32.mrb[0].mxu0
        %v1469 = vadd.f32 0.0, %v1468
        %v1470 = vpop.f32.mrb[0].mxu0
        %1471 = vdwg.mxu0
        %v1472 = vadd.f32 %v1385, %v1464
        %v1473 = vadd.f32 %v1386, %v1469
        %s1474 = sadd.s32 %s1206, 1
        %s1475 = smul.u32 %s1474, 24
        %s1476 = scalar_lea.vmem [#allocation2], %s1475
        %v1477 = vld [vmem:[%s1476] sm:$0xff]
        %v1478 = vld [vmem:[%s1476 + $0x8] sm:$0xff]
        %v1479 = vld [vmem:[%s1476 + $0x10] sm:$0x3]
        %v1481 = vsel %vm292, %v1477, 0
        %v1484 = vsel %vm292, %v1478, 0
        %1486 = vmatprep.subr.mxu0 0.0
        %1487 = vmatpush1.msra.mxu0 %v248
        %1488 = vmatprep.subr.mxu0 0.0
        %1489 = vmatpush1.msra.mxu0 0.0
        %1490 = vmatprep.subr.mxu0 0.0
        %1491 = vmatpush1.msra.mxu0 0.0
        %1492 = vmatprep.subr.mxu0 0.0
        %1493 = vmatpush1.msra.mxu0 0.0
        %1494 = vmatprep.subr.mxu0 0.0
        %1495 = vmatpush1.msra.mxu0 0.0
        %1496 = vmatprep.subr.mxu0 0.0
        %1497 = vmatpush1.msra.mxu0 0.0
        %1498 = vmatprep.subr.mxu0 0.0
        %1499 = vmatpush1.msra.mxu0 0.0
        %1500 = vmatprep.subr.mxu0 0.0
        %1501 = vmatpush1.msra.mxu0 0.0
        %1502 = vmatprep.subr.mxu0 0.0
        %1503 = vmatpush1.msra.mxu0 0.0
        %1504 = vmatprep.subr.mxu0 0.0
        %1505 = vmatpush1.msra.mxu0 0.0
        %1506 = vmatprep.subr.mxu0 0.0
        %1507 = vmatpush1.msra.mxu0 0.0
        %1508 = vmatprep.subr.mxu0 0.0
        %1509 = vmatpush1.msra.mxu0 0.0
        %1510 = vmatprep.subr.mxu0 0.0
        %1511 = vmatpush1.msra.mxu0 0.0
        %1512 = vmatprep.subr.mxu0 0.0
        %1513 = vmatpush1.msra.mxu0 0.0
        %1514 = vmatprep.subr.mxu0 0.0
        %1515 = vmatpush1.msra.mxu0 0.0
        %1516 = vmatprep.subr.mxu0 0.0
        %1517 = vmatpush1.msra.mxu0 0.0
        %1518 = vmatprep.subr.mxu0 0.0
        %1519 = vmatpush1.msra.mxu0 0.0
        %1520 = vmatprep.subr.mxu0 0.0
        %1521 = vmatpush1.msra.mxu0 0.0
        %1522 = vmatprep.subr.mxu0 0.0
        %1523 = vmatpush1.msra.mxu0 0.0
        %1524 = vmatprep.subr.mxu0 0.0
        %1525 = vmatpush1.msra.mxu0 0.0
        %1526 = vmatprep.subr.mxu0 0.0
        %1527 = vmatpush1.msra.mxu0 0.0
        %1528 = vmatprep.subr.mxu0 0.0
        %1529 = vmatpush1.msra.mxu0 0.0
        %1530 = vmatprep.subr.mxu0 0.0
        %1531 = vmatpush1.msra.mxu0 0.0
        %1532 = vmatprep.subr.mxu0 0.0
        %1533 = vmatpush1.msra.mxu0 0.0
        %1534 = vmatprep.subr.mxu0 0.0
        %1535 = vmatpush1.msra.mxu0 0.0
        %1536 = vmatprep.subr.mxu0 0.0
        %1537 = vmatpush1.msra.mxu0 0.0
        %1538 = vmatprep.subr.mxu0 0.0
        %1539 = vmatpush1.msra.mxu0 0.0
        %1540 = vmatprep.subr.mxu0 0.0
        %1541 = vmatpush1.msra.mxu0 0.0
        %1542 = vmatprep.subr.mxu0 0.0
        %1543 = vmatpush1.msra.mxu0 0.0
        %1544 = vmatprep.subr.mxu0 0.0
        %1545 = vmatpush1.msra.mxu0 0.0
        %1546 = vmatprep.subr.mxu0 0.0
        %1547 = vmatpush1.msra.mxu0 0.0
        %1548 = vmatprep.subr.mxu0 0.0
        %1549 = vmatpush1.msra.mxu0 0.0
        %1550 = vmatprep.mubr.f32.mxu0 0.0
        %1551 = vmatmul.mubr.f32.gmra.mrb[0].mxu0 %v1481
        %v1552 = vpop.f32.mrb[0].mxu0
        %v1553 = vadd.f32 0.0, %v1552
        %v1554 = vpop.f32.mrb[0].mxu0
        %1555 = vmatprep.mubr.f32.mxu0 0.0
        %1556 = vmatmul.mubr.f32.gmra.mrb[0].mxu0 %v1484
        %v1557 = vpop.f32.mrb[0].mxu0
        %v1558 = vadd.f32 0.0, %v1557
        %v1559 = vpop.f32.mrb[0].mxu0
        %1560 = vdwg.mxu0
        %v1561 = vadd.f32 %v1472, %v1553
        %v1562 = vadd.f32 %v1473, %v1558
        %v1564 = vrot.slane %v1477, 1
        %v1565 = vrot.slane %v1478, 1
        %v1566 = vsel %vm1300, %v1564, %v1565
        %v1567 = vrot.slane %v1479, 1
        %v1568 = vsel %vm1300, %v1565, %v1567
        %v1569 = vsel %vm292, %v1566, 0
        %v1571 = vsel %vm292, %v1568, 0
        %1573 = vmatprep.subr.mxu0 0.0
        %1574 = vmatpush1.msra.mxu0 %v250
        %1575 = vmatprep.subr.mxu0 0.0
        %1576 = vmatpush1.msra.mxu0 0.0
        %1577 = vmatprep.subr.mxu0 0.0
        %1578 = vmatpush1.msra.mxu0 0.0
        %1579 = vmatprep.subr.mxu0 0.0
        %1580 = vmatpush1.msra.mxu0 0.0
        %1581 = vmatprep.subr.mxu0 0.0
        %1582 = vmatpush1.msra.mxu0 0.0
        %1583 = vmatprep.subr.mxu0 0.0
        %1584 = vmatpush1.msra.mxu0 0.0
        %1585 = vmatprep.subr.mxu0 0.0
        %1586 = vmatpush1.msra.mxu0 0.0
        %1587 = vmatprep.subr.mxu0 0.0
        %1588 = vmatpush1.msra.mxu0 0.0
        %1589 = vmatprep.subr.mxu0 0.0
        %1590 = vmatpush1.msra.mxu0 0.0
        %1591 = vmatprep.subr.mxu0 0.0
        %1592 = vmatpush1.msra.mxu0 0.0
        %1593 = vmatprep.subr.mxu0 0.0
        %1594 = vmatpush1.msra.mxu0 0.0
        %1595 = vmatprep.subr.mxu0 0.0
        %1596 = vmatpush1.msra.mxu0 0.0
        %1597 = vmatprep.subr.mxu0 0.0
        %1598 = vmatpush1.msra.mxu0 0.0
        %1599 = vmatprep.subr.mxu0 0.0
        %1600 = vmatpush1.msra.mxu0 0.0
        %1601 = vmatprep.subr.mxu0 0.0
        %1602 = vmatpush1.msra.mxu0 0.0
        %1603 = vmatprep.subr.mxu0 0.0
        %1604 = vmatpush1.msra.mxu0 0.0
        %1605 = vmatprep.subr.mxu0 0.0
        %1606 = vmatpush1.msra.mxu0 0.0
        %1607 = vmatprep.subr.mxu0 0.0
        %1608 = vmatpush1.msra.mxu0 0.0
        %1609 = vmatprep.subr.mxu0 0.0
        %1610 = vmatpush1.msra.mxu0 0.0
        %1611 = vmatprep.subr.mxu0 0.0
        %1612 = vmatpush1.msra.mxu0 0.0
        %1613 = vmatprep.subr.mxu0 0.0
        %1614 = vmatpush1.msra.mxu0 0.0
        %1615 = vmatprep.subr.mxu0 0.0
        %1616 = vmatpush1.msra.mxu0 0.0
        %1617 = vmatprep.subr.mxu0 0.0
        %1618 = vmatpush1.msra.mxu0 0.0
        %1619 = vmatprep.subr.mxu0 0.0
        %1620 = vmatpush1.msra.mxu0 0.0
        %1621 = vmatprep.subr.mxu0 0.0
        %1622 = vmatpush1.msra.mxu0 0.0
        %1623 = vmatprep.subr.mxu0 0.0
        %1624 = vmatpush1.msra.mxu0 0.0
        %1625 = vmatprep.subr.mxu0 0.0
        %1626 = vmatpush1.msra.mxu0 0.0
        %1627 = vmatprep.subr.mxu0 0.0
        %1628 = vmatpush1.msra.mxu0 0.0
        %1629 = vmatprep.subr.mxu0 0.0
        %1630 = vmatpush1.msra.mxu0 0.0
        %1631 = vmatprep.subr.mxu0 0.0
        %1632 = vmatpush1.msra.mxu0 0.0
        %1633 = vmatprep.subr.mxu0 0.0
        %1634 = vmatpush1.msra.mxu0 0.0
        %1635 = vmatprep.subr.mxu0 0.0
        %1636 = vmatpush1.msra.mxu0 0.0
        %1637 = vmatprep.mubr.f32.mxu0 0.0
        %1638 = vmatmul.mubr.f32.gmra.mrb[0].mxu0 %v1569
        %v1639 = vpop.f32.mrb[0].mxu0
        %v1640 = vadd.f32 0.0, %v1639
        %v1641 = vpop.f32.mrb[0].mxu0
        %1642 = vmatprep.mubr.f32.mxu0 0.0
        %1643 = vmatmul.mubr.f32.gmra.mrb[0].mxu0 %v1571
        %v1644 = vpop.f32.mrb[0].mxu0
        %v1645 = vadd.f32 0.0, %v1644
        %v1646 = vpop.f32.mrb[0].mxu0
        %1647 = vdwg.mxu0
        %v1648 = vadd.f32 %v1561, %v1640
        %v1649 = vadd.f32 %v1562, %v1645
        %v1650 = vrot.slane %v1477, 2
        %v1651 = vrot.slane %v1478, 2
        %v1652 = vsel %vm1387, %v1650, %v1651
        %v1653 = vrot.slane %v1479, 2
        %v1654 = vsel %vm1387, %v1651, %v1653
        %v1655 = vsel %vm292, %v1652, 0
        %v1657 = vsel %vm292, %v1654, 0
        %1659 = vmatprep.subr.mxu0 0.0
        %1660 = vmatpush1.msra.mxu0 %v252
        %1661 = vmatprep.subr.mxu0 0.0
        %1662 = vmatpush1.msra.mxu0 0.0
        %1663 = vmatprep.subr.mxu0 0.0
        %1664 = vmatpush1.msra.mxu0 0.0
        %1665 = vmatprep.subr.mxu0 0.0
        %1666 = vmatpush1.msra.mxu0 0.0
        %1667 = vmatprep.subr.mxu0 0.0
        %1668 = vmatpush1.msra.mxu0 0.0
        %1669 = vmatprep.subr.mxu0 0.0
        %1670 = vmatpush1.msra.mxu0 0.0
        %1671 = vmatprep.subr.mxu0 0.0
        %1672 = vmatpush1.msra.mxu0 0.0
        %1673 = vmatprep.subr.mxu0 0.0
        %1674 = vmatpush1.msra.mxu0 0.0
        %1675 = vmatprep.subr.mxu0 0.0
        %1676 = vmatpush1.msra.mxu0 0.0
        %1677 = vmatprep.subr.mxu0 0.0
        %1678 = vmatpush1.msra.mxu0 0.0
        %1679 = vmatprep.subr.mxu0 0.0
        %1680 = vmatpush1.msra.mxu0 0.0
        %1681 = vmatprep.subr.mxu0 0.0
        %1682 = vmatpush1.msra.mxu0 0.0
        %1683 = vmatprep.subr.mxu0 0.0
        %1684 = vmatpush1.msra.mxu0 0.0
        %1685 = vmatprep.subr.mxu0 0.0
        %1686 = vmatpush1.msra.mxu0 0.0
        %1687 = vmatprep.subr.mxu0 0.0
        %1688 = vmatpush1.msra.mxu0 0.0
        %1689 = vmatprep.subr.mxu0 0.0
        %1690 = vmatpush1.msra.mxu0 0.0
        %1691 = vmatprep.subr.mxu0 0.0
        %1692 = vmatpush1.msra.mxu0 0.0
        %1693 = vmatprep.subr.mxu0 0.0
        %1694 = vmatpush1.msra.mxu0 0.0
        %1695 = vmatprep.subr.mxu0 0.0
        %1696 = vmatpush1.msra.mxu0 0.0
        %1697 = vmatprep.subr.mxu0 0.0
        %1698 = vmatpush1.msra.mxu0 0.0
        %1699 = vmatprep.subr.mxu0 0.0
        %1700 = vmatpush1.msra.mxu0 0.0
        %1701 = vmatprep.subr.mxu0 0.0
        %1702 = vmatpush1.msra.mxu0 0.0
        %1703 = vmatprep.subr.mxu0 0.0
        %1704 = vmatpush1.msra.mxu0 0.0
        %1705 = vmatprep.subr.mxu0 0.0
        %1706 = vmatpush1.msra.mxu0 0.0
        %1707 = vmatprep.subr.mxu0 0.0
        %1708 = vmatpush1.msra.mxu0 0.0
        %1709 = vmatprep.subr.mxu0 0.0
        %1710 = vmatpush1.msra.mxu0 0.0
        %1711 = vmatprep.subr.mxu0 0.0
        %1712 = vmatpush1.msra.mxu0 0.0
        %1713 = vmatprep.subr.mxu0 0.0
        %1714 = vmatpush1.msra.mxu0 0.0
        %1715 = vmatprep.subr.mxu0 0.0
        %1716 = vmatpush1.msra.mxu0 0.0
        %1717 = vmatprep.subr.mxu0 0.0
        %1718 = vmatpush1.msra.mxu0 0.0
        %1719 = vmatprep.subr.mxu0 0.0
        %1720 = vmatpush1.msra.mxu0 0.0
        %1721 = vmatprep.subr.mxu0 0.0
        %1722 = vmatpush1.msra.mxu0 0.0
        %1723 = vmatprep.mubr.f32.mxu0 0.0
        %1724 = vmatmul.mubr.f32.gmra.mrb[0].mxu0 %v1655
        %v1725 = vpop.f32.mrb[0].mxu0
        %v1726 = vadd.f32 0.0, %v1725
        %v1727 = vpop.f32.mrb[0].mxu0
        %1728 = vmatprep.mubr.f32.mxu0 0.0
        %1729 = vmatmul.mubr.f32.gmra.mrb[0].mxu0 %v1657
        %v1730 = vpop.f32.mrb[0].mxu0
        %v1731 = vadd.f32 0.0, %v1730
        %v1732 = vpop.f32.mrb[0].mxu0
        %1733 = vdwg.mxu0
        %v1734 = vadd.f32 %v1648, %v1726
        %v1735 = vadd.f32 %v1649, %v1731
        %s1736 = sadd.s32 %s1206, 2
        %s1737 = smul.u32 %s1736, 24
        %s1738 = scalar_lea.vmem [#allocation2], %s1737
        %v1739 = vld [vmem:[%s1738] sm:$0xff]
        %v1740 = vld [vmem:[%s1738 + $0x8] sm:$0xff]
        %v1741 = vld [vmem:[%s1738 + $0x10] sm:$0x3]
        %v1743 = vsel %vm292, %v1739, 0
        %v1746 = vsel %vm292, %v1740, 0
        %1748 = vmatprep.subr.mxu0 0.0
        %1749 = vmatpush1.msra.mxu0 %v254
        %1750 = vmatprep.subr.mxu0 0.0
        %1751 = vmatpush1.msra.mxu0 0.0
        %1752 = vmatprep.subr.mxu0 0.0
        %1753 = vmatpush1.msra.mxu0 0.0
        %1754 = vmatprep.subr.mxu0 0.0
        %1755 = vmatpush1.msra.mxu0 0.0
        %1756 = vmatprep.subr.mxu0 0.0
        %1757 = vmatpush1.msra.mxu0 0.0
        %1758 = vmatprep.subr.mxu0 0.0
        %1759 = vmatpush1.msra.mxu0 0.0
        %1760 = vmatprep.subr.mxu0 0.0
        %1761 = vmatpush1.msra.mxu0 0.0
        %1762 = vmatprep.subr.mxu0 0.0
        %1763 = vmatpush1.msra.mxu0 0.0
        %1764 = vmatprep.subr.mxu0 0.0
        %1765 = vmatpush1.msra.mxu0 0.0
        %1766 = vmatprep.subr.mxu0 0.0
        %1767 = vmatpush1.msra.mxu0 0.0
        %1768 = vmatprep.subr.mxu0 0.0
        %1769 = vmatpush1.msra.mxu0 0.0
        %1770 = vmatprep.subr.mxu0 0.0
        %1771 = vmatpush1.msra.mxu0 0.0
        %1772 = vmatprep.subr.mxu0 0.0
        %1773 = vmatpush1.msra.mxu0 0.0
        %1774 = vmatprep.subr.mxu0 0.0
        %1775 = vmatpush1.msra.mxu0 0.0
        %1776 = vmatprep.subr.mxu0 0.0
        %1777 = vmatpush1.msra.mxu0 0.0
        %1778 = vmatprep.subr.mxu0 0.0
        %1779 = vmatpush1.msra.mxu0 0.0
        %1780 = vmatprep.subr.mxu0 0.0
        %1781 = vmatpush1.msra.mxu0 0.0
        %1782 = vmatprep.subr.mxu0 0.0
        %1783 = vmatpush1.msra.mxu0 0.0
        %1784 = vmatprep.subr.mxu0 0.0
        %1785 = vmatpush1.msra.mxu0 0.0
        %1786 = vmatprep.subr.mxu0 0.0
        %1787 = vmatpush1.msra.mxu0 0.0
        %1788 = vmatprep.subr.mxu0 0.0
        %1789 = vmatpush1.msra.mxu0 0.0
        %1790 = vmatprep.subr.mxu0 0.0
        %1791 = vmatpush1.msra.mxu0 0.0
        %1792 = vmatprep.subr.mxu0 0.0
        %1793 = vmatpush1.msra.mxu0 0.0
        %1794 = vmatprep.subr.mxu0 0.0
        %1795 = vmatpush1.msra.mxu0 0.0
        %1796 = vmatprep.subr.mxu0 0.0
        %1797 = vmatpush1.msra.mxu0 0.0
        %1798 = vmatprep.subr.mxu0 0.0
        %1799 = vmatpush1.msra.mxu0 0.0
        %1800 = vmatprep.subr.mxu0 0.0
        %1801 = vmatpush1.msra.mxu0 0.0
        %1802 = vmatprep.subr.mxu0 0.0
        %1803 = vmatpush1.msra.mxu0 0.0
        %1804 = vmatprep.subr.mxu0 0.0
        %1805 = vmatpush1.msra.mxu0 0.0
        %1806 = vmatprep.subr.mxu0 0.0
        %1807 = vmatpush1.msra.mxu0 0.0
        %1808 = vmatprep.subr.mxu0 0.0
        %1809 = vmatpush1.msra.mxu0 0.0
        %1810 = vmatprep.subr.mxu0 0.0
        %1811 = vmatpush1.msra.mxu0 0.0
        %1812 = vmatprep.mubr.f32.mxu0 0.0
        %1813 = vmatmul.mubr.f32.gmra.mrb[0].mxu0 %v1743
        %v1814 = vpop.f32.mrb[0].mxu0
        %v1815 = vadd.f32 0.0, %v1814
        %v1816 = vpop.f32.mrb[0].mxu0
        %1817 = vmatprep.mubr.f32.mxu0 0.0
        %1818 = vmatmul.mubr.f32.gmra.mrb[0].mxu0 %v1746
        %v1819 = vpop.f32.mrb[0].mxu0
        %v1820 = vadd.f32 0.0, %v1819
        %v1821 = vpop.f32.mrb[0].mxu0
        %1822 = vdwg.mxu0
        %v1823 = vadd.f32 %v1734, %v1815
        %v1824 = vadd.f32 %v1735, %v1820
        %v1826 = vrot.slane %v1739, 1
        %v1827 = vrot.slane %v1740, 1
        %v1828 = vsel %vm1300, %v1826, %v1827
        %v1829 = vrot.slane %v1741, 1
        %v1830 = vsel %vm1300, %v1827, %v1829
        %v1831 = vsel %vm292, %v1828, 0
        %v1833 = vsel %vm292, %v1830, 0
        %1835 = vmatprep.subr.mxu0 0.0
        %1836 = vmatpush1.msra.mxu0 %v256
        %1837 = vmatprep.subr.mxu0 0.0
        %1838 = vmatpush1.msra.mxu0 0.0
        %1839 = vmatprep.subr.mxu0 0.0
        %1840 = vmatpush1.msra.mxu0 0.0
        %1841 = vmatprep.subr.mxu0 0.0
        %1842 = vmatpush1.msra.mxu0 0.0
        %1843 = vmatprep.subr.mxu0 0.0
        %1844 = vmatpush1.msra.mxu0 0.0
        %1845 = vmatprep.subr.mxu0 0.0
        %1846 = vmatpush1.msra.mxu0 0.0
        %1847 = vmatprep.subr.mxu0 0.0
        %1848 = vmatpush1.msra.mxu0 0.0
        %1849 = vmatprep.subr.mxu0 0.0
        %1850 = vmatpush1.msra.mxu0 0.0
        %1851 = vmatprep.subr.mxu0 0.0
        %1852 = vmatpush1.msra.mxu0 0.0
        %1853 = vmatprep.subr.mxu0 0.0
        %1854 = vmatpush1.msra.mxu0 0.0
        %1855 = vmatprep.subr.mxu0 0.0
        %1856 = vmatpush1.msra.mxu0 0.0
        %1857 = vmatprep.subr.mxu0 0.0
        %1858 = vmatpush1.msra.mxu0 0.0
        %1859 = vmatprep.subr.mxu0 0.0
        %1860 = vmatpush1.msra.mxu0 0.0
        %1861 = vmatprep.subr.mxu0 0.0
        %1862 = vmatpush1.msra.mxu0 0.0
        %1863 = vmatprep.subr.mxu0 0.0
        %1864 = vmatpush1.msra.mxu0 0.0
        %1865 = vmatprep.subr.mxu0 0.0
        %1866 = vmatpush1.msra.mxu0 0.0
        %1867 = vmatprep.subr.mxu0 0.0
        %1868 = vmatpush1.msra.mxu0 0.0
        %1869 = vmatprep.subr.mxu0 0.0
        %1870 = vmatpush1.msra.mxu0 0.0
        %1871 = vmatprep.subr.mxu0 0.0
        %1872 = vmatpush1.msra.mxu0 0.0
        %1873 = vmatprep.subr.mxu0 0.0
        %1874 = vmatpush1.msra.mxu0 0.0
        %1875 = vmatprep.subr.mxu0 0.0
        %1876 = vmatpush1.msra.mxu0 0.0
        %1877 = vmatprep.subr.mxu0 0.0
        %1878 = vmatpush1.msra.mxu0 0.0
        %1879 = vmatprep.subr.mxu0 0.0
        %1880 = vmatpush1.msra.mxu0 0.0
        %1881 = vmatprep.subr.mxu0 0.0
        %1882 = vmatpush1.msra.mxu0 0.0
        %1883 = vmatprep.subr.mxu0 0.0
        %1884 = vmatpush1.msra.mxu0 0.0
        %1885 = vmatprep.subr.mxu0 0.0
        %1886 = vmatpush1.msra.mxu0 0.0
        %1887 = vmatprep.subr.mxu0 0.0
        %1888 = vmatpush1.msra.mxu0 0.0
        %1889 = vmatprep.subr.mxu0 0.0
        %1890 = vmatpush1.msra.mxu0 0.0
        %1891 = vmatprep.subr.mxu0 0.0
        %1892 = vmatpush1.msra.mxu0 0.0
        %1893 = vmatprep.subr.mxu0 0.0
        %1894 = vmatpush1.msra.mxu0 0.0
        %1895 = vmatprep.subr.mxu0 0.0
        %1896 = vmatpush1.msra.mxu0 0.0
        %1897 = vmatprep.subr.mxu0 0.0
        %1898 = vmatpush1.msra.mxu0 0.0
        %1899 = vmatprep.mubr.f32.mxu0 0.0
        %1900 = vmatmul.mubr.f32.gmra.mrb[0].mxu0 %v1831
        %v1901 = vpop.f32.mrb[0].mxu0
        %v1902 = vadd.f32 0.0, %v1901
        %v1903 = vpop.f32.mrb[0].mxu0
        %1904 = vmatprep.mubr.f32.mxu0 0.0
        %1905 = vmatmul.mubr.f32.gmra.mrb[0].mxu0 %v1833
        %v1906 = vpop.f32.mrb[0].mxu0
        %v1907 = vadd.f32 0.0, %v1906
        %v1908 = vpop.f32.mrb[0].mxu0
        %1909 = vdwg.mxu0
        %v1910 = vadd.f32 %v1823, %v1902
        %v1911 = vadd.f32 %v1824, %v1907
        %v1912 = vrot.slane %v1739, 2
        %v1913 = vrot.slane %v1740, 2
        %v1914 = vsel %vm1387, %v1912, %v1913
        %v1915 = vrot.slane %v1741, 2
        %v1916 = vsel %vm1387, %v1913, %v1915
        %v1917 = vsel %vm292, %v1914, 0
        %v1919 = vsel %vm292, %v1916, 0
        %1921 = vmatprep.subr.mxu0 0.0
        %1922 = vmatpush1.msra.mxu0 %v258
        %1923 = vmatprep.subr.mxu0 0.0
        %1924 = vmatpush1.msra.mxu0 0.0
        %1925 = vmatprep.subr.mxu0 0.0
        %1926 = vmatpush1.msra.mxu0 0.0
        %1927 = vmatprep.subr.mxu0 0.0
        %1928 = vmatpush1.msra.mxu0 0.0
        %1929 = vmatprep.subr.mxu0 0.0
        %1930 = vmatpush1.msra.mxu0 0.0
        %1931 = vmatprep.subr.mxu0 0.0
        %1932 = vmatpush1.msra.mxu0 0.0
        %1933 = vmatprep.subr.mxu0 0.0
        %1934 = vmatpush1.msra.mxu0 0.0
        %1935 = vmatprep.subr.mxu0 0.0
        %1936 = vmatpush1.msra.mxu0 0.0
        %1937 = vmatprep.subr.mxu0 0.0
        %1938 = vmatpush1.msra.mxu0 0.0
        %1939 = vmatprep.subr.mxu0 0.0
        %1940 = vmatpush1.msra.mxu0 0.0
        %1941 = vmatprep.subr.mxu0 0.0
        %1942 = vmatpush1.msra.mxu0 0.0
        %1943 = vmatprep.subr.mxu0 0.0
        %1944 = vmatpush1.msra.mxu0 0.0
        %1945 = vmatprep.subr.mxu0 0.0
        %1946 = vmatpush1.msra.mxu0 0.0
        %1947 = vmatprep.subr.mxu0 0.0
        %1948 = vmatpush1.msra.mxu0 0.0
        %1949 = vmatprep.subr.mxu0 0.0
        %1950 = vmatpush1.msra.mxu0 0.0
        %1951 = vmatprep.subr.mxu0 0.0
        %1952 = vmatpush1.msra.mxu0 0.0
        %1953 = vmatprep.subr.mxu0 0.0
        %1954 = vmatpush1.msra.mxu0 0.0
        %1955 = vmatprep.subr.mxu0 0.0
        %1956 = vmatpush1.msra.mxu0 0.0
        %1957 = vmatprep.subr.mxu0 0.0
        %1958 = vmatpush1.msra.mxu0 0.0
        %1959 = vmatprep.subr.mxu0 0.0
        %1960 = vmatpush1.msra.mxu0 0.0
        %1961 = vmatprep.subr.mxu0 0.0
        %1962 = vmatpush1.msra.mxu0 0.0
        %1963 = vmatprep.subr.mxu0 0.0
        %1964 = vmatpush1.msra.mxu0 0.0
        %1965 = vmatprep.subr.mxu0 0.0
        %1966 = vmatpush1.msra.mxu0 0.0
        %1967 = vmatprep.subr.mxu0 0.0
        %1968 = vmatpush1.msra.mxu0 0.0
        %1969 = vmatprep.subr.mxu0 0.0
        %1970 = vmatpush1.msra.mxu0 0.0
        %1971 = vmatprep.subr.mxu0 0.0
        %1972 = vmatpush1.msra.mxu0 0.0
        %1973 = vmatprep.subr.mxu0 0.0
        %1974 = vmatpush1.msra.mxu0 0.0
        %1975 = vmatprep.subr.mxu0 0.0
        %1976 = vmatpush1.msra.mxu0 0.0
        %1977 = vmatprep.subr.mxu0 0.0
        %1978 = vmatpush1.msra.mxu0 0.0
        %1979 = vmatprep.subr.mxu0 0.0
        %1980 = vmatpush1.msra.mxu0 0.0
        %1981 = vmatprep.subr.mxu0 0.0
        %1982 = vmatpush1.msra.mxu0 0.0
        %1983 = vmatprep.subr.mxu0 0.0
        %1984 = vmatpush1.msra.mxu0 0.0
        %1985 = vmatprep.mubr.f32.mxu0 0.0
        %1986 = vmatmul.mubr.f32.gmra.mrb[0].mxu0 %v1917
        %v1987 = vpop.f32.mrb[0].mxu0
        %v1988 = vadd.f32 0.0, %v1987
        %v1989 = vpop.f32.mrb[0].mxu0
        %1990 = vmatprep.mubr.f32.mxu0 0.0
        %1991 = vmatmul.mubr.f32.gmra.mrb[0].mxu0 %v1919
        %v1992 = vpop.f32.mrb[0].mxu0
        %v1993 = vadd.f32 0.0, %v1992
        %v1994 = vpop.f32.mrb[0].mxu0
        %1995 = vdwg.mxu0
        %v1996 = vadd.f32 %v1910, %v1988
        %v1997 = vadd.f32 %v1911, %v1993
        %v1998 = vmax.f32 %v1996, 0.0
        %v1999 = vmax.f32 %v1997, 0.0
        %s2000 = smul.u32 %s1206, 16
        %s2001 = scalar_lea.vmem %s224, %s2000
        %2002 = vst.msk [vmem:[%s2001] sm:$0xff] %vm292, %v1998
        %2003 = vst.msk [vmem:[%s2001 + $0x8] sm:$0xff] %vm292, %v1999
      $region52: #{double_convolution.1} parent=39 // loop_footer
        %s1210 = sadd.s32 1, %s1206
      $region53: #{double_convolution.1} parent=39 // loop_footer_branch
        %1205 = sbr.rel target = $region49
      $region54: #{double_convolution.1} parent=39 // loop_exit
        _
      %p2004 = scmp.lt.s32.totalorder %s16, 1
      %s2005 = scalar_select %p2004, %s16, 1
      %s2006 = smul.addr %s2005, 32
      %s2007 = smul.addr %s2006, 8
      %s2008 = scalar_lea.vmem %s5, %s2007
      // Predicated region
      $region55: #{double_convolution.1} parent=39 // pred_check
        %p2009 = pneg %p144
      $region56: #{double_convolution.1} parent=39 // pred_check_branch
        %2011 = sbr.rel (%p2009) target = $region58
      $region57: #{double_convolution.1} parent=39 // pred_region
        _
      $region58: #{double_convolution.1} parent=39 // pred_fallthru
        _
    $region40: #{double_convolution.1} parent=5 // pred_fallthru
      _
    %p2012 = scmp.le.s32.totalorder 2, %s11
    // Predicated region
    $region59: #{double_convolution.1} parent=5 // pred_check
      %p2013 = pneg %p2012
    $region60: #{double_convolution.1} parent=5 // pred_check_branch
      %2015 = sbr.rel (%p2013) target = $region62
    $region61: #{double_convolution.1} parent=5 // pred_region
      %s2016 = ssub.s32 %s11, 2
      // Predicated region
      $region63: #{double_convolution.1} parent=61 // pred_check
        %p2017 = pneg %p150
      $region64: #{double_convolution.1} parent=61 // pred_check_branch
        %2019 = sbr.rel (%p2017) target = $region66
      $region65: #{double_convolution.1} parent=61 // pred_region
        %p2020 = scmp.lt.s32.totalorder %s17, 1
        %s2021 = scalar_select %p2020, %s17, 1
        %s2022 = smul.addr %s2021, 32
        %s2023 = smul.addr %s2022, 8
        %s2024 = scalar_lea.vmem %s5, %s2023
      $region66: #{double_convolution.1} parent=61 // pred_fallthru
        _
    $region62: #{double_convolution.1} parent=5 // pred_fallthru
      _
  $region6: #{double_convolution.1} parent=0 // loop_footer
    %s15 = sadd.s32 1, %s11
  $region7: #{double_convolution.1} parent=0 // loop_footer_branch
    %10 = sbr.rel target = $region3
  $region8: #{double_convolution.1} parent=0 // loop_exit
    _

</llo_original>
